<compile_context>
chip_gen: v6e
topology: v6e:2x2x1
jax: 0.10.0
libtpu: 0.0.40
codegen_flags: <defaults>
</compile_context>

<pallas_src>
import jax
import jax.numpy as jnp
from jax.experimental import pallas as pl
from jax.experimental.pallas import tpu as pltpu


# ----------------------------- fused kernel --------------------------------

def _make_fused_kernel(mask_configs, n_mid):
    """Build the fused NICE-forward kernel for a static mask_config schedule."""
    L = len(mask_configs)

    def kernel(x_ref, s_ref, w_in_ref, b_in_ref, w_mid_ref, b_mid_ref,
               w_out_ref, b_out_ref, out_ref):
        # Scaling.forward(reverse=True): x * exp(-scale), folded into the
        # prologue (exp(-scale) arrives de-interleaved into even/odd halves).
        even = x_ref[0] * s_ref[0]          # (B, H) * (1, H)
        odd = x_ref[1] * s_ref[1]

        # Coupling layers applied in reverse order, each with reverse=True.
        # Static (unrolled) loop; mask_configs are compile-time Python ints.
        for li in reversed(range(L)):
            off = odd if mask_configs[li] else even
            h = jnp.dot(off, w_in_ref[li],
                        preferred_element_type=jnp.float32) + b_in_ref[li]
            h = jnp.maximum(h, 0.0)
            for j in range(n_mid):
                idx = li * n_mid + j
                h = jnp.dot(h, w_mid_ref[idx],
                            preferred_element_type=jnp.float32) + b_mid_ref[idx]
                h = jnp.maximum(h, 0.0)
            shift = jnp.dot(h, w_out_ref[li],
                            preferred_element_type=jnp.float32) + b_out_ref[li]
            if mask_configs[li]:
                even = even - shift     # transform "on" = column 0 of (B,H,2)
            else:
                odd = odd - shift       # transform "on" = column 1 of (B,H,2)

        out_ref[0, :, :] = even
        out_ref[1, :, :] = odd

    return kernel


def build_nice_forward(mask_configs, n_mid):
    """Returns a jitted forward(w_plus, flat_params) -> (B, D1, D2)."""
    mask_configs = tuple(int(m) for m in mask_configs)
    kernel = _make_fused_kernel(mask_configs, n_mid)
    vmem = pl.BlockSpec(memory_space=pltpu.MemorySpace.VMEM)

    @jax.jit
    def forward(w_plus, flat_params):
        B, D1, D2 = w_plus.shape
        H = D1 * D2 // 2

        # De-interleave ONCE: (B, D1, D2) -> (B, H, 2) -> (2, B, H).
        x_eo = jnp.transpose(w_plus.reshape(B, H, 2), (2, 0, 1))
        # exp(-scale), de-interleaved the same way: (2, 1, H).
        s_eo = jnp.transpose(
            jnp.exp(-flat_params["scale"]).reshape(1, H, 2), (2, 0, 1))

        out_eo = pl.pallas_call(
            kernel,
            out_shape=jax.ShapeDtypeStruct((2, B, H), w_plus.dtype),
            in_specs=[vmem] * 8,
            out_specs=vmem,
        )(x_eo, s_eo,
          flat_params["w_in"], flat_params["b_in"],
          flat_params["w_mid"], flat_params["b_mid"],
          flat_params["w_out"], flat_params["b_out"])

        # Re-interleave ONCE at the end: (2, B, H) -> (B, H, 2) -> (B, D1, D2).
        return jnp.transpose(out_eo, (1, 2, 0)).reshape(B, D1, D2)

    return forward


# --------------------------- parameter init ---------------------------------

def init_params(key, w_plus_dim, coupling=4, mid_dim=32, hidden=3,
                mask_config=1, dtype=jnp.float32):
    """Matches nn.Linear default init; returns (flat_params, mask_configs, n_mid).

    flat_params holds only jnp arrays (jit/vmap-safe); mask_configs is static
    Python metadata.
    """
    D1, D2 = w_plus_dim
    H = (D1 * D2) // 2
    n_mid = hidden - 1

    def linear(k, fan_in, fan_out):
        kw, kb = jax.random.split(k)
        bound = 1.0 / (fan_in ** 0.5)
        w = jax.random.uniform(kw, (fan_in, fan_out), dtype, -bound, bound)
        b = jax.random.uniform(kb, (1, fan_out), dtype, -bound, bound)
        return w, b

    w_in, b_in, w_mid, b_mid, w_out, b_out = [], [], [], [], [], []
    mask_configs = []
    for i in range(coupling):
        key, k_in, k_out, *k_mid = jax.random.split(key, 3 + n_mid)
        wi, bi = linear(k_in, H, mid_dim)
        wo, bo = linear(k_out, mid_dim, H)
        w_in.append(wi); b_in.append(bi)
        w_out.append(wo); b_out.append(bo)
        for km in k_mid:
            wm, bm = linear(km, mid_dim, mid_dim)
            w_mid.append(wm); b_mid.append(bm)
        mask_configs.append((mask_config + i) % 2)

    scale = jnp.zeros((1, D1, D2), dtype)            # nn.Parameter(torch.zeros)

    flat_params = dict(
        scale=scale,                                               # (1, D1, D2)
        w_in=jnp.stack(w_in, 0), b_in=jnp.stack(b_in, 0),          # (L,H,M),(L,1,M)
        w_mid=jnp.stack(w_mid, 0), b_mid=jnp.stack(b_mid, 0),      # (L*nm,M,M),(L*nm,1,M)
        w_out=jnp.stack(w_out, 0), b_out=jnp.stack(b_out, 0),      # (L,M,H),(L,1,H)
    )
    return flat_params, tuple(mask_configs), n_mid


# ------------------------- pure-JAX reference -------------------------------

def reference_forward(w_plus, flat_params, mask_configs, n_mid):
    """Direct transcription of the PyTorch NICE.forward (per-layer interleave)."""
    hp = jax.lax.Precision.HIGHEST
    B, D1, D2 = w_plus.shape
    H = D1 * D2 // 2
    x = w_plus * jnp.exp(-flat_params["scale"])
    L = len(mask_configs)
    for li in reversed(range(L)):
        x2 = x.reshape(B, H, 2)
        if mask_configs[li]:
            on, off = x2[:, :, 0], x2[:, :, 1]
        else:
            off, on = x2[:, :, 0], x2[:, :, 1]
        h = jnp.maximum(
            jnp.matmul(off, flat_params["w_in"][li], precision=hp)
            + flat_params["b_in"][li], 0.0)
        for j in range(n_mid):
            idx = li * n_mid + j
            h = jnp.maximum(
                jnp.matmul(h, flat_params["w_mid"][idx], precision=hp)
                + flat_params["b_mid"][idx], 0.0)
        shift = (jnp.matmul(h, flat_params["w_out"][li], precision=hp)
                 + flat_params["b_out"][li])
        on = on - shift
        if mask_configs[li]:
            x = jnp.stack((on, off), axis=2).reshape(B, D1, D2)
        else:
            x = jnp.stack((off, on), axis=2).reshape(B, D1, D2)
    return x


# --------------------------------- main --------------------------------------

if __name__ == "__main__":
    key = jax.random.PRNGKey(0)
    k_param, k_x = jax.random.split(key)

    # Small shapes consistent with the module: w_plus_dim=(4,16) -> in_out_dim=64,
    # half H=32; mid_dim=32, hidden=3 (2 mid blocks), 4 coupling layers, batch=2.
    w_plus_dim = (4, 16)
    B = 2
    flat_params, mask_configs, n_mid = init_params(
        k_param, w_plus_dim, coupling=4, mid_dim=32, hidden=3, mask_config=1)
    w_plus = jax.random.normal(k_x, (B, w_plus_dim[0], w_plus_dim[1]), jnp.float32)

    nice_forward = build_nice_forward(mask_configs, n_mid)

    out = nice_forward(w_plus, flat_params)
    out = jax.block_until_ready(out)

    assert out.shape == w_plus.shape and out.dtype == jnp.float32

    # Correctness check against a straight transcription of the PyTorch module.
    ref = jax.block_until_ready(
        reference_forward(w_plus, flat_params, mask_configs, n_mid))
    max_err = float(jnp.max(jnp.abs(out - ref)))
    assert max_err < 1e-2, f"mismatch vs reference: max_err={max_err}"

    print("KERNEL_OK")
</pallas_src>

<mosaic_0001>
module attributes {stable_mosaic.version = 11 : i64} {
  func.func @kernel(%arg0: memref<2x2x32xf32, #tpu.memory_space<vmem>>, %arg1: memref<2x1x32xf32, #tpu.memory_space<vmem>>, %arg2: memref<4x32x32xf32, #tpu.memory_space<vmem>>, %arg3: memref<4x1x32xf32, #tpu.memory_space<vmem>>, %arg4: memref<8x32x32xf32, #tpu.memory_space<vmem>>, %arg5: memref<8x1x32xf32, #tpu.memory_space<vmem>>, %arg6: memref<4x32x32xf32, #tpu.memory_space<vmem>>, %arg7: memref<4x1x32xf32, #tpu.memory_space<vmem>>, %arg8: memref<2x2x32xf32, #tpu.memory_space<vmem>>) attributes {dimension_semantics = [], scalar_prefetch = 0 : i64, scratch_operands = 0 : i64, tpu.core_type = #tpu.core_type<tc>} {
    %c0 = arith.constant 0 : index
    %c0_0 = arith.constant 0 : index
    %c0_1 = arith.constant 0 : index
    %0 = vector.load %arg0[%c0, %c0_0, %c0_1] : memref<2x2x32xf32, #tpu.memory_space<vmem>>, vector<1x2x32xf32>
    %1 = vector.shape_cast %0 : vector<1x2x32xf32> to vector<2x32xf32>
    %c0_2 = arith.constant 0 : index
    %c0_3 = arith.constant 0 : index
    %c0_4 = arith.constant 0 : index
    %2 = vector.load %arg1[%c0_2, %c0_3, %c0_4] : memref<2x1x32xf32, #tpu.memory_space<vmem>>, vector<1x1x32xf32>
    %3 = vector.shape_cast %2 : vector<1x1x32xf32> to vector<1x32xf32>
    %4 = vector.broadcast %3 : vector<1x32xf32> to vector<2x32xf32>
    %5 = arith.mulf %1, %4 : vector<2x32xf32>
    %c1 = arith.constant 1 : index
    %c0_5 = arith.constant 0 : index
    %c0_6 = arith.constant 0 : index
    %6 = vector.load %arg0[%c1, %c0_5, %c0_6] : memref<2x2x32xf32, #tpu.memory_space<vmem>>, vector<1x2x32xf32>
    %7 = vector.shape_cast %6 : vector<1x2x32xf32> to vector<2x32xf32>
    %c1_7 = arith.constant 1 : index
    %c0_8 = arith.constant 0 : index
    %c0_9 = arith.constant 0 : index
    %8 = vector.load %arg1[%c1_7, %c0_8, %c0_9] : memref<2x1x32xf32, #tpu.memory_space<vmem>>, vector<1x1x32xf32>
    %9 = vector.shape_cast %8 : vector<1x1x32xf32> to vector<1x32xf32>
    %10 = vector.broadcast %9 : vector<1x32xf32> to vector<2x32xf32>
    %11 = arith.mulf %7, %10 : vector<2x32xf32>
    %c3 = arith.constant 3 : index
    %c0_10 = arith.constant 0 : index
    %c0_11 = arith.constant 0 : index
    %12 = vector.load %arg2[%c3, %c0_10, %c0_11] : memref<4x32x32xf32, #tpu.memory_space<vmem>>, vector<1x32x32xf32>
    %13 = vector.shape_cast %12 : vector<1x32x32xf32> to vector<32x32xf32>
    %cst = arith.constant dense<0.000000e+00> : vector<2x32xf32>
    %14 = tpu.matmul %5, %13, %cst {dimension_numbers = #tpu.dot_dimension_numbers<[1], [0], [0], [1], [0, 0, 1, 1], [], []>} : vector<2x32xf32>, vector<32x32xf32>, vector<2x32xf32> -> vector<2x32xf32>
    %c3_12 = arith.constant 3 : index
    %c0_13 = arith.constant 0 : index
    %c0_14 = arith.constant 0 : index
    %15 = vector.load %arg3[%c3_12, %c0_13, %c0_14] : memref<4x1x32xf32, #tpu.memory_space<vmem>>, vector<1x1x32xf32>
    %16 = vector.shape_cast %15 : vector<1x1x32xf32> to vector<1x32xf32>
    %17 = vector.broadcast %16 : vector<1x32xf32> to vector<2x32xf32>
    %18 = arith.addf %14, %17 : vector<2x32xf32>
    %cst_15 = arith.constant 0.000000e+00 : f32
    %19 = vector.broadcast %cst_15 : f32 to vector<2x32xf32>
    %20 = arith.maximumf %18, %19 : vector<2x32xf32>
    %c6 = arith.constant 6 : index
    %c0_16 = arith.constant 0 : index
    %c0_17 = arith.constant 0 : index
    %21 = vector.load %arg4[%c6, %c0_16, %c0_17] : memref<8x32x32xf32, #tpu.memory_space<vmem>>, vector<1x32x32xf32>
    %22 = vector.shape_cast %21 : vector<1x32x32xf32> to vector<32x32xf32>
    %cst_18 = arith.constant dense<0.000000e+00> : vector<2x32xf32>
    %23 = tpu.matmul %20, %22, %cst_18 {dimension_numbers = #tpu.dot_dimension_numbers<[1], [0], [0], [1], [0, 0, 1, 1], [], []>} : vector<2x32xf32>, vector<32x32xf32>, vector<2x32xf32> -> vector<2x32xf32>
    %c6_19 = arith.constant 6 : index
    %c0_20 = arith.constant 0 : index
    %c0_21 = arith.constant 0 : index
    %24 = vector.load %arg5[%c6_19, %c0_20, %c0_21] : memref<8x1x32xf32, #tpu.memory_space<vmem>>, vector<1x1x32xf32>
    %25 = vector.shape_cast %24 : vector<1x1x32xf32> to vector<1x32xf32>
    %26 = vector.broadcast %25 : vector<1x32xf32> to vector<2x32xf32>
    %27 = arith.addf %23, %26 : vector<2x32xf32>
    %cst_22 = arith.constant 0.000000e+00 : f32
    %28 = vector.broadcast %cst_22 : f32 to vector<2x32xf32>
    %29 = arith.maximumf %27, %28 : vector<2x32xf32>
    %c7 = arith.constant 7 : index
    %c0_23 = arith.constant 0 : index
    %c0_24 = arith.constant 0 : index
    %30 = vector.load %arg4[%c7, %c0_23, %c0_24] : memref<8x32x32xf32, #tpu.memory_space<vmem>>, vector<1x32x32xf32>
    %31 = vector.shape_cast %30 : vector<1x32x32xf32> to vector<32x32xf32>
    %cst_25 = arith.constant dense<0.000000e+00> : vector<2x32xf32>
    %32 = tpu.matmul %29, %31, %cst_25 {dimension_numbers = #tpu.dot_dimension_numbers<[1], [0], [0], [1], [0, 0, 1, 1], [], []>} : vector<2x32xf32>, vector<32x32xf32>, vector<2x32xf32> -> vector<2x32xf32>
    %c7_26 = arith.constant 7 : index
    %c0_27 = arith.constant 0 : index
    %c0_28 = arith.constant 0 : index
    %33 = vector.load %arg5[%c7_26, %c0_27, %c0_28] : memref<8x1x32xf32, #tpu.memory_space<vmem>>, vector<1x1x32xf32>
    %34 = vector.shape_cast %33 : vector<1x1x32xf32> to vector<1x32xf32>
    %35 = vector.broadcast %34 : vector<1x32xf32> to vector<2x32xf32>
    %36 = arith.addf %32, %35 : vector<2x32xf32>
    %cst_29 = arith.constant 0.000000e+00 : f32
    %37 = vector.broadcast %cst_29 : f32 to vector<2x32xf32>
    %38 = arith.maximumf %36, %37 : vector<2x32xf32>
    %c3_30 = arith.constant 3 : index
    %c0_31 = arith.constant 0 : index
    %c0_32 = arith.constant 0 : index
    %39 = vector.load %arg6[%c3_30, %c0_31, %c0_32] : memref<4x32x32xf32, #tpu.memory_space<vmem>>, vector<1x32x32xf32>
    %40 = vector.shape_cast %39 : vector<1x32x32xf32> to vector<32x32xf32>
    %cst_33 = arith.constant dense<0.000000e+00> : vector<2x32xf32>
    %41 = tpu.matmul %38, %40, %cst_33 {dimension_numbers = #tpu.dot_dimension_numbers<[1], [0], [0], [1], [0, 0, 1, 1], [], []>} : vector<2x32xf32>, vector<32x32xf32>, vector<2x32xf32> -> vector<2x32xf32>
    %c3_34 = arith.constant 3 : index
    %c0_35 = arith.constant 0 : index
    %c0_36 = arith.constant 0 : index
    %42 = vector.load %arg7[%c3_34, %c0_35, %c0_36] : memref<4x1x32xf32, #tpu.memory_space<vmem>>, vector<1x1x32xf32>
    %43 = vector.shape_cast %42 : vector<1x1x32xf32> to vector<1x32xf32>
    %44 = vector.broadcast %43 : vector<1x32xf32> to vector<2x32xf32>
    %45 = arith.addf %41, %44 : vector<2x32xf32>
    %46 = arith.subf %11, %45 : vector<2x32xf32>
    %c2 = arith.constant 2 : index
    %c0_37 = arith.constant 0 : index
    %c0_38 = arith.constant 0 : index
    %47 = vector.load %arg2[%c2, %c0_37, %c0_38] : memref<4x32x32xf32, #tpu.memory_space<vmem>>, vector<1x32x32xf32>
    %48 = vector.shape_cast %47 : vector<1x32x32xf32> to vector<32x32xf32>
    %cst_39 = arith.constant dense<0.000000e+00> : vector<2x32xf32>
    %49 = tpu.matmul %46, %48, %cst_39 {dimension_numbers = #tpu.dot_dimension_numbers<[1], [0], [0], [1], [0, 0, 1, 1], [], []>} : vector<2x32xf32>, vector<32x32xf32>, vector<2x32xf32> -> vector<2x32xf32>
    %c2_40 = arith.constant 2 : index
    %c0_41 = arith.constant 0 : index
    %c0_42 = arith.constant 0 : index
    %50 = vector.load %arg3[%c2_40, %c0_41, %c0_42] : memref<4x1x32xf32, #tpu.memory_space<vmem>>, vector<1x1x32xf32>
    %51 = vector.shape_cast %50 : vector<1x1x32xf32> to vector<1x32xf32>
    %52 = vector.broadcast %51 : vector<1x32xf32> to vector<2x32xf32>
    %53 = arith.addf %49, %52 : vector<2x32xf32>
    %cst_43 = arith.constant 0.000000e+00 : f32
    %54 = vector.broadcast %cst_43 : f32 to vector<2x32xf32>
    %55 = arith.maximumf %53, %54 : vector<2x32xf32>
    %c4 = arith.constant 4 : index
    %c0_44 = arith.constant 0 : index
    %c0_45 = arith.constant 0 : index
    %56 = vector.load %arg4[%c4, %c0_44, %c0_45] : memref<8x32x32xf32, #tpu.memory_space<vmem>>, vector<1x32x32xf32>
    %57 = vector.shape_cast %56 : vector<1x32x32xf32> to vector<32x32xf32>
    %cst_46 = arith.constant dense<0.000000e+00> : vector<2x32xf32>
    %58 = tpu.matmul %55, %57, %cst_46 {dimension_numbers = #tpu.dot_dimension_numbers<[1], [0], [0], [1], [0, 0, 1, 1], [], []>} : vector<2x32xf32>, vector<32x32xf32>, vector<2x32xf32> -> vector<2x32xf32>
    %c4_47 = arith.constant 4 : index
    %c0_48 = arith.constant 0 : index
    %c0_49 = arith.constant 0 : index
    %59 = vector.load %arg5[%c4_47, %c0_48, %c0_49] : memref<8x1x32xf32, #tpu.memory_space<vmem>>, vector<1x1x32xf32>
    %60 = vector.shape_cast %59 : vector<1x1x32xf32> to vector<1x32xf32>
    %61 = vector.broadcast %60 : vector<1x32xf32> to vector<2x32xf32>
    %62 = arith.addf %58, %61 : vector<2x32xf32>
    %cst_50 = arith.constant 0.000000e+00 : f32
    %63 = vector.broadcast %cst_50 : f32 to vector<2x32xf32>
    %64 = arith.maximumf %62, %63 : vector<2x32xf32>
    %c5 = arith.constant 5 : index
    %c0_51 = arith.constant 0 : index
    %c0_52 = arith.constant 0 : index
    %65 = vector.load %arg4[%c5, %c0_51, %c0_52] : memref<8x32x32xf32, #tpu.memory_space<vmem>>, vector<1x32x32xf32>
    %66 = vector.shape_cast %65 : vector<1x32x32xf32> to vector<32x32xf32>
    %cst_53 = arith.constant dense<0.000000e+00> : vector<2x32xf32>
    %67 = tpu.matmul %64, %66, %cst_53 {dimension_numbers = #tpu.dot_dimension_numbers<[1], [0], [0], [1], [0, 0, 1, 1], [], []>} : vector<2x32xf32>, vector<32x32xf32>, vector<2x32xf32> -> vector<2x32xf32>
    %c5_54 = arith.constant 5 : index
    %c0_55 = arith.constant 0 : index
    %c0_56 = arith.constant 0 : index
    %68 = vector.load %arg5[%c5_54, %c0_55, %c0_56] : memref<8x1x32xf32, #tpu.memory_space<vmem>>, vector<1x1x32xf32>
    %69 = vector.shape_cast %68 : vector<1x1x32xf32> to vector<1x32xf32>
    %70 = vector.broadcast %69 : vector<1x32xf32> to vector<2x32xf32>
    %71 = arith.addf %67, %70 : vector<2x32xf32>
    %cst_57 = arith.constant 0.000000e+00 : f32
    %72 = vector.broadcast %cst_57 : f32 to vector<2x32xf32>
    %73 = arith.maximumf %71, %72 : vector<2x32xf32>
    %c2_58 = arith.constant 2 : index
    %c0_59 = arith.constant 0 : index
    %c0_60 = arith.constant 0 : index
    %74 = vector.load %arg6[%c2_58, %c0_59, %c0_60] : memref<4x32x32xf32, #tpu.memory_space<vmem>>, vector<1x32x32xf32>
    %75 = vector.shape_cast %74 : vector<1x32x32xf32> to vector<32x32xf32>
    %cst_61 = arith.constant dense<0.000000e+00> : vector<2x32xf32>
    %76 = tpu.matmul %73, %75, %cst_61 {dimension_numbers = #tpu.dot_dimension_numbers<[1], [0], [0], [1], [0, 0, 1, 1], [], []>} : vector<2x32xf32>, vector<32x32xf32>, vector<2x32xf32> -> vector<2x32xf32>
    %c2_62 = arith.constant 2 : index
    %c0_63 = arith.constant 0 : index
    %c0_64 = arith.constant 0 : index
    %77 = vector.load %arg7[%c2_62, %c0_63, %c0_64] : memref<4x1x32xf32, #tpu.memory_space<vmem>>, vector<1x1x32xf32>
    %78 = vector.shape_cast %77 : vector<1x1x32xf32> to vector<1x32xf32>
    %79 = vector.broadcast %78 : vector<1x32xf32> to vector<2x32xf32>
    %80 = arith.addf %76, %79 : vector<2x32xf32>
    %81 = arith.subf %5, %80 : vector<2x32xf32>
    %c1_65 = arith.constant 1 : index
    %c0_66 = arith.constant 0 : index
    %c0_67 = arith.constant 0 : index
    %82 = vector.load %arg2[%c1_65, %c0_66, %c0_67] : memref<4x32x32xf32, #tpu.memory_space<vmem>>, vector<1x32x32xf32>
    %83 = vector.shape_cast %82 : vector<1x32x32xf32> to vector<32x32xf32>
    %cst_68 = arith.constant dense<0.000000e+00> : vector<2x32xf32>
    %84 = tpu.matmul %81, %83, %cst_68 {dimension_numbers = #tpu.dot_dimension_numbers<[1], [0], [0], [1], [0, 0, 1, 1], [], []>} : vector<2x32xf32>, vector<32x32xf32>, vector<2x32xf32> -> vector<2x32xf32>
    %c1_69 = arith.constant 1 : index
    %c0_70 = arith.constant 0 : index
    %c0_71 = arith.constant 0 : index
    %85 = vector.load %arg3[%c1_69, %c0_70, %c0_71] : memref<4x1x32xf32, #tpu.memory_space<vmem>>, vector<1x1x32xf32>
    %86 = vector.shape_cast %85 : vector<1x1x32xf32> to vector<1x32xf32>
    %87 = vector.broadcast %86 : vector<1x32xf32> to vector<2x32xf32>
    %88 = arith.addf %84, %87 : vector<2x32xf32>
    %cst_72 = arith.constant 0.000000e+00 : f32
    %89 = vector.broadcast %cst_72 : f32 to vector<2x32xf32>
    %90 = arith.maximumf %88, %89 : vector<2x32xf32>
    %c2_73 = arith.constant 2 : index
    %c0_74 = arith.constant 0 : index
    %c0_75 = arith.constant 0 : index
    %91 = vector.load %arg4[%c2_73, %c0_74, %c0_75] : memref<8x32x32xf32, #tpu.memory_space<vmem>>, vector<1x32x32xf32>
    %92 = vector.shape_cast %91 : vector<1x32x32xf32> to vector<32x32xf32>
    %cst_76 = arith.constant dense<0.000000e+00> : vector<2x32xf32>
    %93 = tpu.matmul %90, %92, %cst_76 {dimension_numbers = #tpu.dot_dimension_numbers<[1], [0], [0], [1], [0, 0, 1, 1], [], []>} : vector<2x32xf32>, vector<32x32xf32>, vector<2x32xf32> -> vector<2x32xf32>
    %c2_77 = arith.constant 2 : index
    %c0_78 = arith.constant 0 : index
    %c0_79 = arith.constant 0 : index
    %94 = vector.load %arg5[%c2_77, %c0_78, %c0_79] : memref<8x1x32xf32, #tpu.memory_space<vmem>>, vector<1x1x32xf32>
    %95 = vector.shape_cast %94 : vector<1x1x32xf32> to vector<1x32xf32>
    %96 = vector.broadcast %95 : vector<1x32xf32> to vector<2x32xf32>
    %97 = arith.addf %93, %96 : vector<2x32xf32>
    %cst_80 = arith.constant 0.000000e+00 : f32
    %98 = vector.broadcast %cst_80 : f32 to vector<2x32xf32>
    %99 = arith.maximumf %97, %98 : vector<2x32xf32>
    %c3_81 = arith.constant 3 : index
    %c0_82 = arith.constant 0 : index
    %c0_83 = arith.constant 0 : index
    %100 = vector.load %arg4[%c3_81, %c0_82, %c0_83] : memref<8x32x32xf32, #tpu.memory_space<vmem>>, vector<1x32x32xf32>
    %101 = vector.shape_cast %100 : vector<1x32x32xf32> to vector<32x32xf32>
    %cst_84 = arith.constant dense<0.000000e+00> : vector<2x32xf32>
    %102 = tpu.matmul %99, %101, %cst_84 {dimension_numbers = #tpu.dot_dimension_numbers<[1], [0], [0], [1], [0, 0, 1, 1], [], []>} : vector<2x32xf32>, vector<32x32xf32>, vector<2x32xf32> -> vector<2x32xf32>
    %c3_85 = arith.constant 3 : index
    %c0_86 = arith.constant 0 : index
    %c0_87 = arith.constant 0 : index
    %103 = vector.load %arg5[%c3_85, %c0_86, %c0_87] : memref<8x1x32xf32, #tpu.memory_space<vmem>>, vector<1x1x32xf32>
    %104 = vector.shape_cast %103 : vector<1x1x32xf32> to vector<1x32xf32>
    %105 = vector.broadcast %104 : vector<1x32xf32> to vector<2x32xf32>
    %106 = arith.addf %102, %105 : vector<2x32xf32>
    %cst_88 = arith.constant 0.000000e+00 : f32
    %107 = vector.broadcast %cst_88 : f32 to vector<2x32xf32>
    %108 = arith.maximumf %106, %107 : vector<2x32xf32>
    %c1_89 = arith.constant 1 : index
    %c0_90 = arith.constant 0 : index
    %c0_91 = arith.constant 0 : index
    %109 = vector.load %arg6[%c1_89, %c0_90, %c0_91] : memref<4x32x32xf32, #tpu.memory_space<vmem>>, vector<1x32x32xf32>
    %110 = vector.shape_cast %109 : vector<1x32x32xf32> to vector<32x32xf32>
    %cst_92 = arith.constant dense<0.000000e+00> : vector<2x32xf32>
    %111 = tpu.matmul %108, %110, %cst_92 {dimension_numbers = #tpu.dot_dimension_numbers<[1], [0], [0], [1], [0, 0, 1, 1], [], []>} : vector<2x32xf32>, vector<32x32xf32>, vector<2x32xf32> -> vector<2x32xf32>
    %c1_93 = arith.constant 1 : index
    %c0_94 = arith.constant 0 : index
    %c0_95 = arith.constant 0 : index
    %112 = vector.load %arg7[%c1_93, %c0_94, %c0_95] : memref<4x1x32xf32, #tpu.memory_space<vmem>>, vector<1x1x32xf32>
    %113 = vector.shape_cast %112 : vector<1x1x32xf32> to vector<1x32xf32>
    %114 = vector.broadcast %113 : vector<1x32xf32> to vector<2x32xf32>
    %115 = arith.addf %111, %114 : vector<2x32xf32>
    %116 = arith.subf %46, %115 : vector<2x32xf32>
    %c0_96 = arith.constant 0 : index
    %c0_97 = arith.constant 0 : index
    %c0_98 = arith.constant 0 : index
    %117 = vector.load %arg2[%c0_96, %c0_97, %c0_98] : memref<4x32x32xf32, #tpu.memory_space<vmem>>, vector<1x32x32xf32>
    %118 = vector.shape_cast %117 : vector<1x32x32xf32> to vector<32x32xf32>
    %cst_99 = arith.constant dense<0.000000e+00> : vector<2x32xf32>
    %119 = tpu.matmul %116, %118, %cst_99 {dimension_numbers = #tpu.dot_dimension_numbers<[1], [0], [0], [1], [0, 0, 1, 1], [], []>} : vector<2x32xf32>, vector<32x32xf32>, vector<2x32xf32> -> vector<2x32xf32>
    %c0_100 = arith.constant 0 : index
    %c0_101 = arith.constant 0 : index
    %c0_102 = arith.constant 0 : index
    %120 = vector.load %arg3[%c0_100, %c0_101, %c0_102] : memref<4x1x32xf32, #tpu.memory_space<vmem>>, vector<1x1x32xf32>
    %121 = vector.shape_cast %120 : vector<1x1x32xf32> to vector<1x32xf32>
    %122 = vector.broadcast %121 : vector<1x32xf32> to vector<2x32xf32>
    %123 = arith.addf %119, %122 : vector<2x32xf32>
    %cst_103 = arith.constant 0.000000e+00 : f32
    %124 = vector.broadcast %cst_103 : f32 to vector<2x32xf32>
    %125 = arith.maximumf %123, %124 : vector<2x32xf32>
    %c0_104 = arith.constant 0 : index
    %c0_105 = arith.constant 0 : index
    %c0_106 = arith.constant 0 : index
    %126 = vector.load %arg4[%c0_104, %c0_105, %c0_106] : memref<8x32x32xf32, #tpu.memory_space<vmem>>, vector<1x32x32xf32>
    %127 = vector.shape_cast %126 : vector<1x32x32xf32> to vector<32x32xf32>
    %cst_107 = arith.constant dense<0.000000e+00> : vector<2x32xf32>
    %128 = tpu.matmul %125, %127, %cst_107 {dimension_numbers = #tpu.dot_dimension_numbers<[1], [0], [0], [1], [0, 0, 1, 1], [], []>} : vector<2x32xf32>, vector<32x32xf32>, vector<2x32xf32> -> vector<2x32xf32>
    %c0_108 = arith.constant 0 : index
    %c0_109 = arith.constant 0 : index
    %c0_110 = arith.constant 0 : index
    %129 = vector.load %arg5[%c0_108, %c0_109, %c0_110] : memref<8x1x32xf32, #tpu.memory_space<vmem>>, vector<1x1x32xf32>
    %130 = vector.shape_cast %129 : vector<1x1x32xf32> to vector<1x32xf32>
    %131 = vector.broadcast %130 : vector<1x32xf32> to vector<2x32xf32>
    %132 = arith.addf %128, %131 : vector<2x32xf32>
    %cst_111 = arith.constant 0.000000e+00 : f32
    %133 = vector.broadcast %cst_111 : f32 to vector<2x32xf32>
    %134 = arith.maximumf %132, %133 : vector<2x32xf32>
    %c1_112 = arith.constant 1 : index
    %c0_113 = arith.constant 0 : index
    %c0_114 = arith.constant 0 : index
    %135 = vector.load %arg4[%c1_112, %c0_113, %c0_114] : memref<8x32x32xf32, #tpu.memory_space<vmem>>, vector<1x32x32xf32>
    %136 = vector.shape_cast %135 : vector<1x32x32xf32> to vector<32x32xf32>
    %cst_115 = arith.constant dense<0.000000e+00> : vector<2x32xf32>
    %137 = tpu.matmul %134, %136, %cst_115 {dimension_numbers = #tpu.dot_dimension_numbers<[1], [0], [0], [1], [0, 0, 1, 1], [], []>} : vector<2x32xf32>, vector<32x32xf32>, vector<2x32xf32> -> vector<2x32xf32>
    %c1_116 = arith.constant 1 : index
    %c0_117 = arith.constant 0 : index
    %c0_118 = arith.constant 0 : index
    %138 = vector.load %arg5[%c1_116, %c0_117, %c0_118] : memref<8x1x32xf32, #tpu.memory_space<vmem>>, vector<1x1x32xf32>
    %139 = vector.shape_cast %138 : vector<1x1x32xf32> to vector<1x32xf32>
    %140 = vector.broadcast %139 : vector<1x32xf32> to vector<2x32xf32>
    %141 = arith.addf %137, %140 : vector<2x32xf32>
    %cst_119 = arith.constant 0.000000e+00 : f32
    %142 = vector.broadcast %cst_119 : f32 to vector<2x32xf32>
    %143 = arith.maximumf %141, %142 : vector<2x32xf32>
    %c0_120 = arith.constant 0 : index
    %c0_121 = arith.constant 0 : index
    %c0_122 = arith.constant 0 : index
    %144 = vector.load %arg6[%c0_120, %c0_121, %c0_122] : memref<4x32x32xf32, #tpu.memory_space<vmem>>, vector<1x32x32xf32>
    %145 = vector.shape_cast %144 : vector<1x32x32xf32> to vector<32x32xf32>
    %cst_123 = arith.constant dense<0.000000e+00> : vector<2x32xf32>
    %146 = tpu.matmul %143, %145, %cst_123 {dimension_numbers = #tpu.dot_dimension_numbers<[1], [0], [0], [1], [0, 0, 1, 1], [], []>} : vector<2x32xf32>, vector<32x32xf32>, vector<2x32xf32> -> vector<2x32xf32>
    %c0_124 = arith.constant 0 : index
    %c0_125 = arith.constant 0 : index
    %c0_126 = arith.constant 0 : index
    %147 = vector.load %arg7[%c0_124, %c0_125, %c0_126] : memref<4x1x32xf32, #tpu.memory_space<vmem>>, vector<1x1x32xf32>
    %148 = vector.shape_cast %147 : vector<1x1x32xf32> to vector<1x32xf32>
    %149 = vector.broadcast %148 : vector<1x32xf32> to vector<2x32xf32>
    %150 = arith.addf %146, %149 : vector<2x32xf32>
    %151 = arith.subf %81, %150 : vector<2x32xf32>
    %c0_127 = arith.constant 0 : index
    %c0_128 = arith.constant 0 : index
    %c0_129 = arith.constant 0 : index
    %152 = vector.load %arg8[%c0_127, %c0_128, %c0_129] : memref<2x2x32xf32, #tpu.memory_space<vmem>>, vector<1x2x32xf32>
    %153 = vector.shape_cast %152 : vector<1x2x32xf32> to vector<2x32xf32>
    %154 = vector.shape_cast %151 : vector<2x32xf32> to vector<1x2x32xf32>
    tpu.vector_store %arg8[%c0_127, %c0_128, %c0_129], %154 {strides = array<i32>} : memref<2x2x32xf32, #tpu.memory_space<vmem>>, vector<1x2x32xf32>,
    %c1_130 = arith.constant 1 : index
    %c0_131 = arith.constant 0 : index
    %c0_132 = arith.constant 0 : index
    %155 = vector.load %arg8[%c1_130, %c0_131, %c0_132] : memref<2x2x32xf32, #tpu.memory_space<vmem>>, vector<1x2x32xf32>
    %156 = vector.shape_cast %155 : vector<1x2x32xf32> to vector<2x32xf32>
    %157 = vector.shape_cast %116 : vector<2x32xf32> to vector<1x2x32xf32>
    tpu.vector_store %arg8[%c1_130, %c0_131, %c0_132], %157 {strides = array<i32>} : memref<2x2x32xf32, #tpu.memory_space<vmem>>, vector<1x2x32xf32>,
    return
  }
}

</mosaic_0001>

<llo_original>
// kernel: forward.1
$region0: #{forward.1}
  #allocation0 [shape = 'u32[]', space=smem, size = 0x4, offset = 0x4, fixed_abs, tag = 'smem constant byte address 0x4 - core index']
  #allocation1 [shape = 'u32[144,128]{1,0:T(1,128)}', space=vmem, size = 0x12000, scoped, tag = 'internal scratch']
  %s0 = inlined_call_operand.vmem [shape: f32[2,2,32], index: 0, kind: input, shape index: {}]
  %s1 = inlined_call_operand.vmem [shape: f32[2,1,32], index: 1, kind: input, shape index: {}]
  %s2 = inlined_call_operand.vmem [shape: f32[4,32,32], index: 2, kind: input, shape index: {}]
  %s3 = inlined_call_operand.vmem [shape: f32[4,1,32], index: 3, kind: input, shape index: {}]
  %s4 = inlined_call_operand.hbm [shape: f32[8,32,32], index: 4, kind: input, shape index: {}]
  %s5 = inlined_call_operand.vmem [shape: f32[8,1,32], index: 5, kind: input, shape index: {}]
  %s6 = inlined_call_operand.hbm [shape: f32[4,32,32], index: 6, kind: input, shape index: {}]
  %s7 = inlined_call_operand.vmem [shape: f32[4,1,32], index: 7, kind: input, shape index: {}]
  %s8 = inlined_call_operand.vmem [shape: f32[2,2,32], index: 8, kind: output, shape index: {}]
  %s9 = sld [smem:[#allocation0]]
  $region50: #{forward.1} parent=0
    _
  %s11 = ssub.s32 1, %s9
  %s12 = scalar_select 0, %s11, %s9
  $region1: #{forward.1} parent=0
    #allocation2 [shape = 'u8[131072]{0}', space=vmem, size = 0x20000, scoped, tag = 'input window, operand 4, single buffered']
    #allocation3 [shape = 's32[1]{0}', space=sflag, size = 0x4, scoped, tag = 'scoped memory for forward.1']
    #allocation4 [shape = 'u8[65536]{0}', space=vmem, size = 0x10000, scoped, tag = 'input window, operand 6, single buffered']
    #allocation5 [shape = 's32[1]{0}', space=sflag, size = 0x4, scoped, tag = 'scoped memory for forward.1']
    %13 = vsyncpa [#allocation3], 0
    %14 = vsyncpa [#allocation5], 0
    // Predicated region
    $region2: #{forward.1} parent=1 // pred_check
      _
    $region3: #{forward.1} parent=1 // pred_check_branch
      %16 = sbr.rel (0) target = $region5
    $region4: #{forward.1} parent=1 // pred_region
      _
    $region5: #{forward.1} parent=1 // pred_fallthru
      _
    // Predicated region
    $region6: #{forward.1} parent=1 // pred_check
      _
    $region7: #{forward.1} parent=1 // pred_check_branch
      %18 = sbr.rel (0) target = $region9
    $region8: #{forward.1} parent=1 // pred_region
      _
    $region9: #{forward.1} parent=1 // pred_fallthru
      _
    // Predicated region
    $region10: #{forward.1} parent=1 // pred_check
      _
    $region11: #{forward.1} parent=1 // pred_check_branch
      %20 = sbr.rel (0) target = $region13
    $region12: #{forward.1} parent=1 // pred_region
      _
    $region13: #{forward.1} parent=1 // pred_fallthru
      _
    // Predicated region
    $region14: #{forward.1} parent=1 // pred_check
      _
    $region15: #{forward.1} parent=1 // pred_check_branch
      %22 = sbr.rel (0) target = $region17
    $region16: #{forward.1} parent=1 // pred_region
      _
    $region17: #{forward.1} parent=1 // pred_fallthru
      _
    // Predicated region
    $region18: #{forward.1} parent=1 // pred_check
      _
    $region19: #{forward.1} parent=1 // pred_check_branch
      %24 = sbr.rel (0) target = $region21
    $region20: #{forward.1} parent=1 // pred_region
      %s26 = ssub.s32 4096, 4096
      %27 = vsyncadd [#allocation3], %s26
      %s28 = sshll.u32 [#allocation2], 4
      %s29 = int_to_ptr.vmem [resolvable:$true] %s28
      %34 = dma.hbm_to_vmem [thread:$0]  %s4, 4096, %s29, [#allocation3], 128, 128, 8
    $region21: #{forward.1} parent=1 // pred_fallthru
      _
    // Predicated region
    $region22: #{forward.1} parent=1 // pred_check
      _
    $region23: #{forward.1} parent=1 // pred_check_branch
      %36 = sbr.rel (0) target = $region25
    $region24: #{forward.1} parent=1 // pred_region
      _
    $region25: #{forward.1} parent=1 // pred_fallthru
      _
    // Predicated region
    $region26: #{forward.1} parent=1 // pred_check
      _
    $region27: #{forward.1} parent=1 // pred_check_branch
      %38 = sbr.rel (0) target = $region29
    $region28: #{forward.1} parent=1 // pred_region
      %s40 = ssub.s32 2048, 2048
      %41 = vsyncadd [#allocation5], %s40
      %s42 = sshll.u32 [#allocation4], 4
      %s43 = int_to_ptr.vmem [resolvable:$true] %s42
      %48 = dma.hbm_to_vmem [thread:$0]  %s6, 2048, %s43, [#allocation5], 128, 128, 8
    $region29: #{forward.1} parent=1 // pred_fallthru
      _
    // Predicated region
    $region30: #{forward.1} parent=1 // pred_check
      _
    $region31: #{forward.1} parent=1 // pred_check_branch
      %50 = sbr.rel (0) target = $region33
    $region32: #{forward.1} parent=1 // pred_region
      _
    $region33: #{forward.1} parent=1 // pred_fallthru
      _
    // Predicated region
    $region34: #{forward.1} parent=1 // pred_check
      _
    $region35: #{forward.1} parent=1 // pred_check_branch
      %52 = sbr.rel (0) target = $region37
    $region36: #{forward.1} parent=1 // pred_region
      %53 = dma.done [#allocation3], 4096
    $region37: #{forward.1} parent=1 // pred_fallthru
      _
    // Predicated region
    $region38: #{forward.1} parent=1 // pred_check
      _
    $region39: #{forward.1} parent=1 // pred_check_branch
      %55 = sbr.rel (0) target = $region41
    $region40: #{forward.1} parent=1 // pred_region
      %56 = dma.done [#allocation5], 2048
    $region41: #{forward.1} parent=1 // pred_fallthru
      _
    %v57 = vld [vmem:[%s0] sm:$0x3]
    %v58 = vld [vmem:[%s1] sm:$0x1]
    %v60 = vlaneseq
    %v61 = vshrl.u32 %v60, 7
    %v62 = vsub.s32 0, %v61
    %v63 = vrot.slane %v58, %v62
    %v65 = vmul.f32 %v57, %v63
    %s66 = scalar_lea.vmem %s0, 2
    %v67 = vld [vmem:[%s66] sm:$0x3]
    %s68 = scalar_lea.vmem %s1, 1
    %v69 = vld [vmem:[%s68] sm:$0x1]
    %v71 = vlaneseq
    %v72 = vshrl.u32 %v71, 7
    %v73 = vsub.s32 0, %v72
    %v74 = vrot.slane %v69, %v73
    %v76 = vmul.f32 %v67, %v74
    %s77 = scalar_lea.vmem %s2, 96
    %v78 = vld [vmem:[%s77] sm:$0xff]
    %v79 = vld [vmem:[%s77 + $0x8] sm:$0xff]
    %v80 = vld [vmem:[%s77 + $0x10] sm:$0xff]
    %v81 = vld [vmem:[%s77 + $0x18] sm:$0xff]
    %s82 = scalar_lea.vmem %s3, 3
    %v83 = vld [vmem:[%s82] sm:$0x1]
    %v85 = vlaneseq
    %v86 = vshrl.u32 %v85, 7
    %v87 = vsub.s32 0, %v86
    %v88 = vrot.slane %v83, %v87
    %vm90 = vcmask 261120
    %v92 = vsel %vm90, %v65, 0
    %94 = vmatprep.subr.mxu0 0.0
    %95 = vmatpush1.msra.mxu0 0.0
    %96 = vmatprep.subr.mxu0 0.0
    %97 = vmatpush1.msra.mxu0 0.0
    %98 = vmatprep.subr.mxu0 0.0
    %99 = vmatpush1.msra.mxu0 0.0
    %100 = vmatprep.subr.mxu0 0.0
    %101 = vmatpush1.msra.mxu0 0.0
    %102 = vmatprep.subr.mxu0 0.0
    %103 = vmatpush1.msra.mxu0 0.0
    %104 = vmatprep.subr.mxu0 0.0
    %105 = vmatpush1.msra.mxu0 0.0
    %106 = vmatprep.subr.mxu0 0.0
    %107 = vmatpush1.msra.mxu0 0.0
    %108 = vmatprep.subr.mxu0 0.0
    %109 = vmatpush1.msra.mxu0 0.0
    %110 = vmatprep.subr.mxu0 0.0
    %111 = vmatpush1.msra.mxu0 0.0
    %112 = vmatprep.subr.mxu0 0.0
    %113 = vmatpush1.msra.mxu0 0.0
    %114 = vmatprep.subr.mxu0 0.0
    %115 = vmatpush1.msra.mxu0 0.0
    %116 = vmatprep.subr.mxu0 0.0
    %117 = vmatpush1.msra.mxu0 0.0
    %118 = vmatprep.subr.mxu0 0.0
    %119 = vmatpush1.msra.mxu0 %v81
    %120 = vmatprep.subr.mxu0 0.0
    %121 = vmatpush1.msra.mxu0 %v80
    %122 = vmatprep.subr.mxu0 0.0
    %123 = vmatpush1.msra.mxu0 %v79
    %124 = vmatprep.subr.mxu0 0.0
    %125 = vmatpush1.msra.mxu0 %v78
    %126 = vmatprep.subr.mxu0 0.0
    %127 = vmatpush2.msra.mxu0 0.0
    %128 = vmatprep.subr.mxu0 0.0
    %129 = vmatpush2.msra.mxu0 0.0
    %130 = vmatprep.subr.mxu0 0.0
    %131 = vmatpush2.msra.mxu0 0.0
    %132 = vmatprep.subr.mxu0 0.0
    %133 = vmatpush2.msra.mxu0 0.0
    %134 = vmatprep.subr.mxu0 0.0
    %135 = vmatpush2.msra.mxu0 0.0
    %136 = vmatprep.subr.mxu0 0.0
    %137 = vmatpush2.msra.mxu0 0.0
    %138 = vmatprep.subr.mxu0 0.0
    %139 = vmatpush2.msra.mxu0 0.0
    %140 = vmatprep.subr.mxu0 0.0
    %141 = vmatpush2.msra.mxu0 0.0
    %142 = vmatprep.subr.mxu0 0.0
    %143 = vmatpush2.msra.mxu0 0.0
    %144 = vmatprep.subr.mxu0 0.0
    %145 = vmatpush2.msra.mxu0 0.0
    %146 = vmatprep.subr.mxu0 0.0
    %147 = vmatpush2.msra.mxu0 0.0
    %148 = vmatprep.subr.mxu0 0.0
    %149 = vmatpush2.msra.mxu0 0.0
    %150 = vmatprep.subr.mxu0 0.0
    %151 = vmatpush2.msra.mxu0 0.0
    %152 = vmatprep.subr.mxu0 0.0
    %153 = vmatpush2.msra.mxu0 0.0
    %154 = vmatprep.subr.mxu0 0.0
    %155 = vmatpush2.msra.mxu0 0.0
    %156 = vmatprep.subr.mxu0 0.0
    %157 = vmatpush2.msra.mxu0 0.0
    %158 = vmatprep.mubr.f32.mxu0 0.0
    %159 = vmatmul.mubr.f32.gmra.mxu0 %v92
    %v160 = vpop.f32.mrf.mxu0
    %v161 = vadd.f32 %v88, %v160
    %v162 = vpop.f32.mrf.mxu0
    %163 = vdwg.mxu0
    %v164 = vmax.f32 %v161, 0.0
    %s165 = scalar_lea.vmem [#allocation2], 192
    %v166 = vld [vmem:[%s165] sm:$0xff]
    %v167 = vld [vmem:[%s165 + $0x8] sm:$0xff]
    %v168 = vld [vmem:[%s165 + $0x10] sm:$0xff]
    %v169 = vld [vmem:[%s165 + $0x18] sm:$0xff]
    %s170 = scalar_lea.vmem %s5, 6
    %v171 = vld [vmem:[%s170] sm:$0x1]
    %v173 = vlaneseq
    %v174 = vshrl.u32 %v173, 7
    %v175 = vsub.s32 0, %v174
    %v176 = vrot.slane %v171, %v175
    %v179 = vsel %vm90, %v164, 0
    %181 = vmatprep.subr.mxu0 0.0
    %182 = vmatpush1.msra.mxu0 0.0
    %183 = vmatprep.subr.mxu0 0.0
    %184 = vmatpush1.msra.mxu0 0.0
    %185 = vmatprep.subr.mxu0 0.0
    %186 = vmatpush1.msra.mxu0 0.0
    %187 = vmatprep.subr.mxu0 0.0
    %188 = vmatpush1.msra.mxu0 0.0
    %189 = vmatprep.subr.mxu0 0.0
    %190 = vmatpush1.msra.mxu0 0.0
    %191 = vmatprep.subr.mxu0 0.0
    %192 = vmatpush1.msra.mxu0 0.0
    %193 = vmatprep.subr.mxu0 0.0
    %194 = vmatpush1.msra.mxu0 0.0
    %195 = vmatprep.subr.mxu0 0.0
    %196 = vmatpush1.msra.mxu0 0.0
    %197 = vmatprep.subr.mxu0 0.0
    %198 = vmatpush1.msra.mxu0 0.0
    %199 = vmatprep.subr.mxu0 0.0
    %200 = vmatpush1.msra.mxu0 0.0
    %201 = vmatprep.subr.mxu0 0.0
    %202 = vmatpush1.msra.mxu0 0.0
    %203 = vmatprep.subr.mxu0 0.0
    %204 = vmatpush1.msra.mxu0 0.0
    %205 = vmatprep.subr.mxu0 0.0
    %206 = vmatpush1.msra.mxu0 %v169
    %207 = vmatprep.subr.mxu0 0.0
    %208 = vmatpush1.msra.mxu0 %v168
    %209 = vmatprep.subr.mxu0 0.0
    %210 = vmatpush1.msra.mxu0 %v167
    %211 = vmatprep.subr.mxu0 0.0
    %212 = vmatpush1.msra.mxu0 %v166
    %213 = vmatprep.subr.mxu0 0.0
    %214 = vmatpush2.msra.mxu0 0.0
    %215 = vmatprep.subr.mxu0 0.0
    %216 = vmatpush2.msra.mxu0 0.0
    %217 = vmatprep.subr.mxu0 0.0
    %218 = vmatpush2.msra.mxu0 0.0
    %219 = vmatprep.subr.mxu0 0.0
    %220 = vmatpush2.msra.mxu0 0.0
    %221 = vmatprep.subr.mxu0 0.0
    %222 = vmatpush2.msra.mxu0 0.0
    %223 = vmatprep.subr.mxu0 0.0
    %224 = vmatpush2.msra.mxu0 0.0
    %225 = vmatprep.subr.mxu0 0.0
    %226 = vmatpush2.msra.mxu0 0.0
    %227 = vmatprep.subr.mxu0 0.0
    %228 = vmatpush2.msra.mxu0 0.0
    %229 = vmatprep.subr.mxu0 0.0
    %230 = vmatpush2.msra.mxu0 0.0
    %231 = vmatprep.subr.mxu0 0.0
    %232 = vmatpush2.msra.mxu0 0.0
    %233 = vmatprep.subr.mxu0 0.0
    %234 = vmatpush2.msra.mxu0 0.0
    %235 = vmatprep.subr.mxu0 0.0
    %236 = vmatpush2.msra.mxu0 0.0
    %237 = vmatprep.subr.mxu0 0.0
    %238 = vmatpush2.msra.mxu0 0.0
    %239 = vmatprep.subr.mxu0 0.0
    %240 = vmatpush2.msra.mxu0 0.0
    %241 = vmatprep.subr.mxu0 0.0
    %242 = vmatpush2.msra.mxu0 0.0
    %243 = vmatprep.subr.mxu0 0.0
    %244 = vmatpush2.msra.mxu0 0.0
    %245 = vmatprep.mubr.f32.mxu0 0.0
    %246 = vmatmul.mubr.f32.gmra.mxu0 %v179
    %v247 = vpop.f32.mrf.mxu0
    %v248 = vadd.f32 %v176, %v247
    %v249 = vpop.f32.mrf.mxu0
    %250 = vdwg.mxu0
    %v251 = vmax.f32 %v248, 0.0
    %s252 = scalar_lea.vmem [#allocation2], 224
    %v253 = vld [vmem:[%s252] sm:$0xff]
    %v254 = vld [vmem:[%s252 + $0x8] sm:$0xff]
    %v255 = vld [vmem:[%s252 + $0x10] sm:$0xff]
    %v256 = vld [vmem:[%s252 + $0x18] sm:$0xff]
    %s257 = scalar_lea.vmem %s5, 7
    %v258 = vld [vmem:[%s257] sm:$0x1]
    %v260 = vlaneseq
    %v261 = vshrl.u32 %v260, 7
    %v262 = vsub.s32 0, %v261
    %v263 = vrot.slane %v258, %v262
    %v266 = vsel %vm90, %v251, 0
    %268 = vmatprep.subr.mxu0 0.0
    %269 = vmatpush1.msra.mxu0 0.0
    %270 = vmatprep.subr.mxu0 0.0
    %271 = vmatpush1.msra.mxu0 0.0
    %272 = vmatprep.subr.mxu0 0.0
    %273 = vmatpush1.msra.mxu0 0.0
    %274 = vmatprep.subr.mxu0 0.0
    %275 = vmatpush1.msra.mxu0 0.0
    %276 = vmatprep.subr.mxu0 0.0
    %277 = vmatpush1.msra.mxu0 0.0
    %278 = vmatprep.subr.mxu0 0.0
    %279 = vmatpush1.msra.mxu0 0.0
    %280 = vmatprep.subr.mxu0 0.0
    %281 = vmatpush1.msra.mxu0 0.0
    %282 = vmatprep.subr.mxu0 0.0
    %283 = vmatpush1.msra.mxu0 0.0
    %284 = vmatprep.subr.mxu0 0.0
    %285 = vmatpush1.msra.mxu0 0.0
    %286 = vmatprep.subr.mxu0 0.0
    %287 = vmatpush1.msra.mxu0 0.0
    %288 = vmatprep.subr.mxu0 0.0
    %289 = vmatpush1.msra.mxu0 0.0
    %290 = vmatprep.subr.mxu0 0.0
    %291 = vmatpush1.msra.mxu0 0.0
    %292 = vmatprep.subr.mxu0 0.0
    %293 = vmatpush1.msra.mxu0 %v256
    %294 = vmatprep.subr.mxu0 0.0
    %295 = vmatpush1.msra.mxu0 %v255
    %296 = vmatprep.subr.mxu0 0.0
    %297 = vmatpush1.msra.mxu0 %v254
    %298 = vmatprep.subr.mxu0 0.0
    %299 = vmatpush1.msra.mxu0 %v253
    %300 = vmatprep.subr.mxu0 0.0
    %301 = vmatpush2.msra.mxu0 0.0
    %302 = vmatprep.subr.mxu0 0.0
    %303 = vmatpush2.msra.mxu0 0.0
    %304 = vmatprep.subr.mxu0 0.0
    %305 = vmatpush2.msra.mxu0 0.0
    %306 = vmatprep.subr.mxu0 0.0
    %307 = vmatpush2.msra.mxu0 0.0
    %308 = vmatprep.subr.mxu0 0.0
    %309 = vmatpush2.msra.mxu0 0.0
    %310 = vmatprep.subr.mxu0 0.0
    %311 = vmatpush2.msra.mxu0 0.0
    %312 = vmatprep.subr.mxu0 0.0
    %313 = vmatpush2.msra.mxu0 0.0
    %314 = vmatprep.subr.mxu0 0.0
    %315 = vmatpush2.msra.mxu0 0.0
    %316 = vmatprep.subr.mxu0 0.0
    %317 = vmatpush2.msra.mxu0 0.0
    %318 = vmatprep.subr.mxu0 0.0
    %319 = vmatpush2.msra.mxu0 0.0
    %320 = vmatprep.subr.mxu0 0.0
    %321 = vmatpush2.msra.mxu0 0.0
    %322 = vmatprep.subr.mxu0 0.0
    %323 = vmatpush2.msra.mxu0 0.0
    %324 = vmatprep.subr.mxu0 0.0
    %325 = vmatpush2.msra.mxu0 0.0
    %326 = vmatprep.subr.mxu0 0.0
    %327 = vmatpush2.msra.mxu0 0.0
    %328 = vmatprep.subr.mxu0 0.0
    %329 = vmatpush2.msra.mxu0 0.0
    %330 = vmatprep.subr.mxu0 0.0
    %331 = vmatpush2.msra.mxu0 0.0
    %332 = vmatprep.mubr.f32.mxu0 0.0
    %333 = vmatmul.mubr.f32.gmra.mxu0 %v266
    %v334 = vpop.f32.mrf.mxu0
    %v335 = vadd.f32 %v263, %v334
    %v336 = vpop.f32.mrf.mxu0
    %337 = vdwg.mxu0
    %v338 = vmax.f32 %v335, 0.0
    %s339 = scalar_lea.vmem [#allocation4], 96
    %v340 = vld [vmem:[%s339] sm:$0xff]
    %v341 = vld [vmem:[%s339 + $0x8] sm:$0xff]
    %v342 = vld [vmem:[%s339 + $0x10] sm:$0xff]
    %v343 = vld [vmem:[%s339 + $0x18] sm:$0xff]
    %s344 = scalar_lea.vmem %s7, 3
    %v345 = vld [vmem:[%s344] sm:$0x1]
    %v347 = vlaneseq
    %v348 = vshrl.u32 %v347, 7
    %v349 = vsub.s32 0, %v348
    %v350 = vrot.slane %v345, %v349
    %v353 = vsel %vm90, %v338, 0
    %355 = vmatprep.subr.mxu0 0.0
    %356 = vmatpush1.msra.mxu0 0.0
    %357 = vmatprep.subr.mxu0 0.0
    %358 = vmatpush1.msra.mxu0 0.0
    %359 = vmatprep.subr.mxu0 0.0
    %360 = vmatpush1.msra.mxu0 0.0
    %361 = vmatprep.subr.mxu0 0.0
    %362 = vmatpush1.msra.mxu0 0.0
    %363 = vmatprep.subr.mxu0 0.0
    %364 = vmatpush1.msra.mxu0 0.0
    %365 = vmatprep.subr.mxu0 0.0
    %366 = vmatpush1.msra.mxu0 0.0
    %367 = vmatprep.subr.mxu0 0.0
    %368 = vmatpush1.msra.mxu0 0.0
    %369 = vmatprep.subr.mxu0 0.0
    %370 = vmatpush1.msra.mxu0 0.0
    %371 = vmatprep.subr.mxu0 0.0
    %372 = vmatpush1.msra.mxu0 0.0
    %373 = vmatprep.subr.mxu0 0.0
    %374 = vmatpush1.msra.mxu0 0.0
    %375 = vmatprep.subr.mxu0 0.0
    %376 = vmatpush1.msra.mxu0 0.0
    %377 = vmatprep.subr.mxu0 0.0
    %378 = vmatpush1.msra.mxu0 0.0
    %379 = vmatprep.subr.mxu0 0.0
    %380 = vmatpush1.msra.mxu0 %v343
    %381 = vmatprep.subr.mxu0 0.0
    %382 = vmatpush1.msra.mxu0 %v342
    %383 = vmatprep.subr.mxu0 0.0
    %384 = vmatpush1.msra.mxu0 %v341
    %385 = vmatprep.subr.mxu0 0.0
    %386 = vmatpush1.msra.mxu0 %v340
    %387 = vmatprep.subr.mxu0 0.0
    %388 = vmatpush2.msra.mxu0 0.0
    %389 = vmatprep.subr.mxu0 0.0
    %390 = vmatpush2.msra.mxu0 0.0
    %391 = vmatprep.subr.mxu0 0.0
    %392 = vmatpush2.msra.mxu0 0.0
    %393 = vmatprep.subr.mxu0 0.0
    %394 = vmatpush2.msra.mxu0 0.0
    %395 = vmatprep.subr.mxu0 0.0
    %396 = vmatpush2.msra.mxu0 0.0
    %397 = vmatprep.subr.mxu0 0.0
    %398 = vmatpush2.msra.mxu0 0.0
    %399 = vmatprep.subr.mxu0 0.0
    %400 = vmatpush2.msra.mxu0 0.0
    %401 = vmatprep.subr.mxu0 0.0
    %402 = vmatpush2.msra.mxu0 0.0
    %403 = vmatprep.subr.mxu0 0.0
    %404 = vmatpush2.msra.mxu0 0.0
    %405 = vmatprep.subr.mxu0 0.0
    %406 = vmatpush2.msra.mxu0 0.0
    %407 = vmatprep.subr.mxu0 0.0
    %408 = vmatpush2.msra.mxu0 0.0
    %409 = vmatprep.subr.mxu0 0.0
    %410 = vmatpush2.msra.mxu0 0.0
    %411 = vmatprep.subr.mxu0 0.0
    %412 = vmatpush2.msra.mxu0 0.0
    %413 = vmatprep.subr.mxu0 0.0
    %414 = vmatpush2.msra.mxu0 0.0
    %415 = vmatprep.subr.mxu0 0.0
    %416 = vmatpush2.msra.mxu0 0.0
    %417 = vmatprep.subr.mxu0 0.0
    %418 = vmatpush2.msra.mxu0 0.0
    %419 = vmatprep.mubr.f32.mxu0 0.0
    %420 = vmatmul.mubr.f32.gmra.mxu0 %v353
    %v421 = vpop.f32.mrf.mxu0
    %v422 = vadd.f32 %v350, %v421
    %v423 = vpop.f32.mrf.mxu0
    %424 = vdwg.mxu0
    %v425 = vsub.f32 %v76, %v422
    %s426 = scalar_lea.vmem %s2, 64
    %v427 = vld [vmem:[%s426] sm:$0xff]
    %v428 = vld [vmem:[%s426 + $0x8] sm:$0xff]
    %v429 = vld [vmem:[%s426 + $0x10] sm:$0xff]
    %v430 = vld [vmem:[%s426 + $0x18] sm:$0xff]
    %s431 = scalar_lea.vmem %s3, 2
    %v432 = vld [vmem:[%s431] sm:$0x1]
    %v434 = vlaneseq
    %v435 = vshrl.u32 %v434, 7
    %v436 = vsub.s32 0, %v435
    %v437 = vrot.slane %v432, %v436
    %v440 = vsel %vm90, %v425, 0
    %442 = vmatprep.subr.mxu0 0.0
    %443 = vmatpush1.msra.mxu0 0.0
    %444 = vmatprep.subr.mxu0 0.0
    %445 = vmatpush1.msra.mxu0 0.0
    %446 = vmatprep.subr.mxu0 0.0
    %447 = vmatpush1.msra.mxu0 0.0
    %448 = vmatprep.subr.mxu0 0.0
    %449 = vmatpush1.msra.mxu0 0.0
    %450 = vmatprep.subr.mxu0 0.0
    %451 = vmatpush1.msra.mxu0 0.0
    %452 = vmatprep.subr.mxu0 0.0
    %453 = vmatpush1.msra.mxu0 0.0
    %454 = vmatprep.subr.mxu0 0.0
    %455 = vmatpush1.msra.mxu0 0.0
    %456 = vmatprep.subr.mxu0 0.0
    %457 = vmatpush1.msra.mxu0 0.0
    %458 = vmatprep.subr.mxu0 0.0
    %459 = vmatpush1.msra.mxu0 0.0
    %460 = vmatprep.subr.mxu0 0.0
    %461 = vmatpush1.msra.mxu0 0.0
    %462 = vmatprep.subr.mxu0 0.0
    %463 = vmatpush1.msra.mxu0 0.0
    %464 = vmatprep.subr.mxu0 0.0
    %465 = vmatpush1.msra.mxu0 0.0
    %466 = vmatprep.subr.mxu0 0.0
    %467 = vmatpush1.msra.mxu0 %v430
    %468 = vmatprep.subr.mxu0 0.0
    %469 = vmatpush1.msra.mxu0 %v429
    %470 = vmatprep.subr.mxu0 0.0
    %471 = vmatpush1.msra.mxu0 %v428
    %472 = vmatprep.subr.mxu0 0.0
    %473 = vmatpush1.msra.mxu0 %v427
    %474 = vmatprep.subr.mxu0 0.0
    %475 = vmatpush2.msra.mxu0 0.0
    %476 = vmatprep.subr.mxu0 0.0
    %477 = vmatpush2.msra.mxu0 0.0
    %478 = vmatprep.subr.mxu0 0.0
    %479 = vmatpush2.msra.mxu0 0.0
    %480 = vmatprep.subr.mxu0 0.0
    %481 = vmatpush2.msra.mxu0 0.0
    %482 = vmatprep.subr.mxu0 0.0
    %483 = vmatpush2.msra.mxu0 0.0
    %484 = vmatprep.subr.mxu0 0.0
    %485 = vmatpush2.msra.mxu0 0.0
    %486 = vmatprep.subr.mxu0 0.0
    %487 = vmatpush2.msra.mxu0 0.0
    %488 = vmatprep.subr.mxu0 0.0
    %489 = vmatpush2.msra.mxu0 0.0
    %490 = vmatprep.subr.mxu0 0.0
    %491 = vmatpush2.msra.mxu0 0.0
    %492 = vmatprep.subr.mxu0 0.0
    %493 = vmatpush2.msra.mxu0 0.0
    %494 = vmatprep.subr.mxu0 0.0
    %495 = vmatpush2.msra.mxu0 0.0
    %496 = vmatprep.subr.mxu0 0.0
    %497 = vmatpush2.msra.mxu0 0.0
    %498 = vmatprep.subr.mxu0 0.0
    %499 = vmatpush2.msra.mxu0 0.0
    %500 = vmatprep.subr.mxu0 0.0
    %501 = vmatpush2.msra.mxu0 0.0
    %502 = vmatprep.subr.mxu0 0.0
    %503 = vmatpush2.msra.mxu0 0.0
    %504 = vmatprep.subr.mxu0 0.0
    %505 = vmatpush2.msra.mxu0 0.0
    %506 = vmatprep.mubr.f32.mxu0 0.0
    %507 = vmatmul.mubr.f32.gmra.mxu0 %v440
    %v508 = vpop.f32.mrf.mxu0
    %v509 = vadd.f32 %v437, %v508
    %v510 = vpop.f32.mrf.mxu0
    %511 = vdwg.mxu0
    %v512 = vmax.f32 %v509, 0.0
    %s513 = scalar_lea.vmem [#allocation2], 128
    %v514 = vld [vmem:[%s513] sm:$0xff]
    %v515 = vld [vmem:[%s513 + $0x8] sm:$0xff]
    %v516 = vld [vmem:[%s513 + $0x10] sm:$0xff]
    %v517 = vld [vmem:[%s513 + $0x18] sm:$0xff]
    %s518 = scalar_lea.vmem %s5, 4
    %v519 = vld [vmem:[%s518] sm:$0x1]
    %v521 = vlaneseq
    %v522 = vshrl.u32 %v521, 7
    %v523 = vsub.s32 0, %v522
    %v524 = vrot.slane %v519, %v523
    %v527 = vsel %vm90, %v512, 0
    %529 = vmatprep.subr.mxu0 0.0
    %530 = vmatpush1.msra.mxu0 0.0
    %531 = vmatprep.subr.mxu0 0.0
    %532 = vmatpush1.msra.mxu0 0.0
    %533 = vmatprep.subr.mxu0 0.0
    %534 = vmatpush1.msra.mxu0 0.0
    %535 = vmatprep.subr.mxu0 0.0
    %536 = vmatpush1.msra.mxu0 0.0
    %537 = vmatprep.subr.mxu0 0.0
    %538 = vmatpush1.msra.mxu0 0.0
    %539 = vmatprep.subr.mxu0 0.0
    %540 = vmatpush1.msra.mxu0 0.0
    %541 = vmatprep.subr.mxu0 0.0
    %542 = vmatpush1.msra.mxu0 0.0
    %543 = vmatprep.subr.mxu0 0.0
    %544 = vmatpush1.msra.mxu0 0.0
    %545 = vmatprep.subr.mxu0 0.0
    %546 = vmatpush1.msra.mxu0 0.0
    %547 = vmatprep.subr.mxu0 0.0
    %548 = vmatpush1.msra.mxu0 0.0
    %549 = vmatprep.subr.mxu0 0.0
    %550 = vmatpush1.msra.mxu0 0.0
    %551 = vmatprep.subr.mxu0 0.0
    %552 = vmatpush1.msra.mxu0 0.0
    %553 = vmatprep.subr.mxu0 0.0
    %554 = vmatpush1.msra.mxu0 %v517
    %555 = vmatprep.subr.mxu0 0.0
    %556 = vmatpush1.msra.mxu0 %v516
    %557 = vmatprep.subr.mxu0 0.0
    %558 = vmatpush1.msra.mxu0 %v515
    %559 = vmatprep.subr.mxu0 0.0
    %560 = vmatpush1.msra.mxu0 %v514
    %561 = vmatprep.subr.mxu0 0.0
    %562 = vmatpush2.msra.mxu0 0.0
    %563 = vmatprep.subr.mxu0 0.0
    %564 = vmatpush2.msra.mxu0 0.0
    %565 = vmatprep.subr.mxu0 0.0
    %566 = vmatpush2.msra.mxu0 0.0
    %567 = vmatprep.subr.mxu0 0.0
    %568 = vmatpush2.msra.mxu0 0.0
    %569 = vmatprep.subr.mxu0 0.0
    %570 = vmatpush2.msra.mxu0 0.0
    %571 = vmatprep.subr.mxu0 0.0
    %572 = vmatpush2.msra.mxu0 0.0
    %573 = vmatprep.subr.mxu0 0.0
    %574 = vmatpush2.msra.mxu0 0.0
    %575 = vmatprep.subr.mxu0 0.0
    %576 = vmatpush2.msra.mxu0 0.0
    %577 = vmatprep.subr.mxu0 0.0
    %578 = vmatpush2.msra.mxu0 0.0
    %579 = vmatprep.subr.mxu0 0.0
    %580 = vmatpush2.msra.mxu0 0.0
    %581 = vmatprep.subr.mxu0 0.0
    %582 = vmatpush2.msra.mxu0 0.0
    %583 = vmatprep.subr.mxu0 0.0
    %584 = vmatpush2.msra.mxu0 0.0
    %585 = vmatprep.subr.mxu0 0.0
    %586 = vmatpush2.msra.mxu0 0.0
    %587 = vmatprep.subr.mxu0 0.0
    %588 = vmatpush2.msra.mxu0 0.0
    %589 = vmatprep.subr.mxu0 0.0
    %590 = vmatpush2.msra.mxu0 0.0
    %591 = vmatprep.subr.mxu0 0.0
    %592 = vmatpush2.msra.mxu0 0.0
    %593 = vmatprep.mubr.f32.mxu0 0.0
    %594 = vmatmul.mubr.f32.gmra.mxu0 %v527
    %v595 = vpop.f32.mrf.mxu0
    %v596 = vadd.f32 %v524, %v595
    %v597 = vpop.f32.mrf.mxu0
    %598 = vdwg.mxu0
    %v599 = vmax.f32 %v596, 0.0
    %s600 = scalar_lea.vmem [#allocation2], 160
    %v601 = vld [vmem:[%s600] sm:$0xff]
    %v602 = vld [vmem:[%s600 + $0x8] sm:$0xff]
    %v603 = vld [vmem:[%s600 + $0x10] sm:$0xff]
    %v604 = vld [vmem:[%s600 + $0x18] sm:$0xff]
    %s605 = scalar_lea.vmem %s5, 5
    %v606 = vld [vmem:[%s605] sm:$0x1]
    %v608 = vlaneseq
    %v609 = vshrl.u32 %v608, 7
    %v610 = vsub.s32 0, %v609
    %v611 = vrot.slane %v606, %v610
    %v614 = vsel %vm90, %v599, 0
    %616 = vmatprep.subr.mxu0 0.0
    %617 = vmatpush1.msra.mxu0 0.0
    %618 = vmatprep.subr.mxu0 0.0
    %619 = vmatpush1.msra.mxu0 0.0
    %620 = vmatprep.subr.mxu0 0.0
    %621 = vmatpush1.msra.mxu0 0.0
    %622 = vmatprep.subr.mxu0 0.0
    %623 = vmatpush1.msra.mxu0 0.0
    %624 = vmatprep.subr.mxu0 0.0
    %625 = vmatpush1.msra.mxu0 0.0
    %626 = vmatprep.subr.mxu0 0.0
    %627 = vmatpush1.msra.mxu0 0.0
    %628 = vmatprep.subr.mxu0 0.0
    %629 = vmatpush1.msra.mxu0 0.0
    %630 = vmatprep.subr.mxu0 0.0
    %631 = vmatpush1.msra.mxu0 0.0
    %632 = vmatprep.subr.mxu0 0.0
    %633 = vmatpush1.msra.mxu0 0.0
    %634 = vmatprep.subr.mxu0 0.0
    %635 = vmatpush1.msra.mxu0 0.0
    %636 = vmatprep.subr.mxu0 0.0
    %637 = vmatpush1.msra.mxu0 0.0
    %638 = vmatprep.subr.mxu0 0.0
    %639 = vmatpush1.msra.mxu0 0.0
    %640 = vmatprep.subr.mxu0 0.0
    %641 = vmatpush1.msra.mxu0 %v604
    %642 = vmatprep.subr.mxu0 0.0
    %643 = vmatpush1.msra.mxu0 %v603
    %644 = vmatprep.subr.mxu0 0.0
    %645 = vmatpush1.msra.mxu0 %v602
    %646 = vmatprep.subr.mxu0 0.0
    %647 = vmatpush1.msra.mxu0 %v601
    %648 = vmatprep.subr.mxu0 0.0
    %649 = vmatpush2.msra.mxu0 0.0
    %650 = vmatprep.subr.mxu0 0.0
    %651 = vmatpush2.msra.mxu0 0.0
    %652 = vmatprep.subr.mxu0 0.0
    %653 = vmatpush2.msra.mxu0 0.0
    %654 = vmatprep.subr.mxu0 0.0
    %655 = vmatpush2.msra.mxu0 0.0
    %656 = vmatprep.subr.mxu0 0.0
    %657 = vmatpush2.msra.mxu0 0.0
    %658 = vmatprep.subr.mxu0 0.0
    %659 = vmatpush2.msra.mxu0 0.0
    %660 = vmatprep.subr.mxu0 0.0
    %661 = vmatpush2.msra.mxu0 0.0
    %662 = vmatprep.subr.mxu0 0.0
    %663 = vmatpush2.msra.mxu0 0.0
    %664 = vmatprep.subr.mxu0 0.0
    %665 = vmatpush2.msra.mxu0 0.0
    %666 = vmatprep.subr.mxu0 0.0
    %667 = vmatpush2.msra.mxu0 0.0
    %668 = vmatprep.subr.mxu0 0.0
    %669 = vmatpush2.msra.mxu0 0.0
    %670 = vmatprep.subr.mxu0 0.0
    %671 = vmatpush2.msra.mxu0 0.0
    %672 = vmatprep.subr.mxu0 0.0
    %673 = vmatpush2.msra.mxu0 0.0
    %674 = vmatprep.subr.mxu0 0.0
    %675 = vmatpush2.msra.mxu0 0.0
    %676 = vmatprep.subr.mxu0 0.0
    %677 = vmatpush2.msra.mxu0 0.0
    %678 = vmatprep.subr.mxu0 0.0
    %679 = vmatpush2.msra.mxu0 0.0
    %680 = vmatprep.mubr.f32.mxu0 0.0
    %681 = vmatmul.mubr.f32.gmra.mxu0 %v614
    %v682 = vpop.f32.mrf.mxu0
    %v683 = vadd.f32 %v611, %v682
    %v684 = vpop.f32.mrf.mxu0
    %685 = vdwg.mxu0
    %v686 = vmax.f32 %v683, 0.0
    %s687 = scalar_lea.vmem [#allocation4], 64
    %v688 = vld [vmem:[%s687] sm:$0xff]
    %v689 = vld [vmem:[%s687 + $0x8] sm:$0xff]
    %v690 = vld [vmem:[%s687 + $0x10] sm:$0xff]
    %v691 = vld [vmem:[%s687 + $0x18] sm:$0xff]
    %s692 = scalar_lea.vmem %s7, 2
    %v693 = vld [vmem:[%s692] sm:$0x1]
    %v695 = vlaneseq
    %v696 = vshrl.u32 %v695, 7
    %v697 = vsub.s32 0, %v696
    %v698 = vrot.slane %v693, %v697
    %v701 = vsel %vm90, %v686, 0
    %703 = vmatprep.subr.mxu0 0.0
    %704 = vmatpush1.msra.mxu0 0.0
    %705 = vmatprep.subr.mxu0 0.0
    %706 = vmatpush1.msra.mxu0 0.0
    %707 = vmatprep.subr.mxu0 0.0
    %708 = vmatpush1.msra.mxu0 0.0
    %709 = vmatprep.subr.mxu0 0.0
    %710 = vmatpush1.msra.mxu0 0.0
    %711 = vmatprep.subr.mxu0 0.0
    %712 = vmatpush1.msra.mxu0 0.0
    %713 = vmatprep.subr.mxu0 0.0
    %714 = vmatpush1.msra.mxu0 0.0
    %715 = vmatprep.subr.mxu0 0.0
    %716 = vmatpush1.msra.mxu0 0.0
    %717 = vmatprep.subr.mxu0 0.0
    %718 = vmatpush1.msra.mxu0 0.0
    %719 = vmatprep.subr.mxu0 0.0
    %720 = vmatpush1.msra.mxu0 0.0
    %721 = vmatprep.subr.mxu0 0.0
    %722 = vmatpush1.msra.mxu0 0.0
    %723 = vmatprep.subr.mxu0 0.0
    %724 = vmatpush1.msra.mxu0 0.0
    %725 = vmatprep.subr.mxu0 0.0
    %726 = vmatpush1.msra.mxu0 0.0
    %727 = vmatprep.subr.mxu0 0.0
    %728 = vmatpush1.msra.mxu0 %v691
    %729 = vmatprep.subr.mxu0 0.0
    %730 = vmatpush1.msra.mxu0 %v690
    %731 = vmatprep.subr.mxu0 0.0
    %732 = vmatpush1.msra.mxu0 %v689
    %733 = vmatprep.subr.mxu0 0.0
    %734 = vmatpush1.msra.mxu0 %v688
    %735 = vmatprep.subr.mxu0 0.0
    %736 = vmatpush2.msra.mxu0 0.0
    %737 = vmatprep.subr.mxu0 0.0
    %738 = vmatpush2.msra.mxu0 0.0
    %739 = vmatprep.subr.mxu0 0.0
    %740 = vmatpush2.msra.mxu0 0.0
    %741 = vmatprep.subr.mxu0 0.0
    %742 = vmatpush2.msra.mxu0 0.0
    %743 = vmatprep.subr.mxu0 0.0
    %744 = vmatpush2.msra.mxu0 0.0
    %745 = vmatprep.subr.mxu0 0.0
    %746 = vmatpush2.msra.mxu0 0.0
    %747 = vmatprep.subr.mxu0 0.0
    %748 = vmatpush2.msra.mxu0 0.0
    %749 = vmatprep.subr.mxu0 0.0
    %750 = vmatpush2.msra.mxu0 0.0
    %751 = vmatprep.subr.mxu0 0.0
    %752 = vmatpush2.msra.mxu0 0.0
    %753 = vmatprep.subr.mxu0 0.0
    %754 = vmatpush2.msra.mxu0 0.0
    %755 = vmatprep.subr.mxu0 0.0
    %756 = vmatpush2.msra.mxu0 0.0
    %757 = vmatprep.subr.mxu0 0.0
    %758 = vmatpush2.msra.mxu0 0.0
    %759 = vmatprep.subr.mxu0 0.0
    %760 = vmatpush2.msra.mxu0 0.0
    %761 = vmatprep.subr.mxu0 0.0
    %762 = vmatpush2.msra.mxu0 0.0
    %763 = vmatprep.subr.mxu0 0.0
    %764 = vmatpush2.msra.mxu0 0.0
    %765 = vmatprep.subr.mxu0 0.0
    %766 = vmatpush2.msra.mxu0 0.0
    %767 = vmatprep.mubr.f32.mxu0 0.0
    %768 = vmatmul.mubr.f32.gmra.mxu0 %v701
    %v769 = vpop.f32.mrf.mxu0
    %v770 = vadd.f32 %v698, %v769
    %v771 = vpop.f32.mrf.mxu0
    %772 = vdwg.mxu0
    %v773 = vsub.f32 %v65, %v770
    %s774 = scalar_lea.vmem %s2, 32
    %v775 = vld [vmem:[%s774] sm:$0xff]
    %v776 = vld [vmem:[%s774 + $0x8] sm:$0xff]
    %v777 = vld [vmem:[%s774 + $0x10] sm:$0xff]
    %v778 = vld [vmem:[%s774 + $0x18] sm:$0xff]
    %s779 = scalar_lea.vmem %s3, 1
    %v780 = vld [vmem:[%s779] sm:$0x1]
    %v782 = vlaneseq
    %v783 = vshrl.u32 %v782, 7
    %v784 = vsub.s32 0, %v783
    %v785 = vrot.slane %v780, %v784
    %v788 = vsel %vm90, %v773, 0
    %790 = vmatprep.subr.mxu0 0.0
    %791 = vmatpush1.msra.mxu0 0.0
    %792 = vmatprep.subr.mxu0 0.0
    %793 = vmatpush1.msra.mxu0 0.0
    %794 = vmatprep.subr.mxu0 0.0
    %795 = vmatpush1.msra.mxu0 0.0
    %796 = vmatprep.subr.mxu0 0.0
    %797 = vmatpush1.msra.mxu0 0.0
    %798 = vmatprep.subr.mxu0 0.0
    %799 = vmatpush1.msra.mxu0 0.0
    %800 = vmatprep.subr.mxu0 0.0
    %801 = vmatpush1.msra.mxu0 0.0
    %802 = vmatprep.subr.mxu0 0.0
    %803 = vmatpush1.msra.mxu0 0.0
    %804 = vmatprep.subr.mxu0 0.0
    %805 = vmatpush1.msra.mxu0 0.0
    %806 = vmatprep.subr.mxu0 0.0
    %807 = vmatpush1.msra.mxu0 0.0
    %808 = vmatprep.subr.mxu0 0.0
    %809 = vmatpush1.msra.mxu0 0.0
    %810 = vmatprep.subr.mxu0 0.0
    %811 = vmatpush1.msra.mxu0 0.0
    %812 = vmatprep.subr.mxu0 0.0
    %813 = vmatpush1.msra.mxu0 0.0
    %814 = vmatprep.subr.mxu0 0.0
    %815 = vmatpush1.msra.mxu0 %v778
    %816 = vmatprep.subr.mxu0 0.0
    %817 = vmatpush1.msra.mxu0 %v777
    %818 = vmatprep.subr.mxu0 0.0
    %819 = vmatpush1.msra.mxu0 %v776
    %820 = vmatprep.subr.mxu0 0.0
    %821 = vmatpush1.msra.mxu0 %v775
    %822 = vmatprep.subr.mxu0 0.0
    %823 = vmatpush2.msra.mxu0 0.0
    %824 = vmatprep.subr.mxu0 0.0
    %825 = vmatpush2.msra.mxu0 0.0
    %826 = vmatprep.subr.mxu0 0.0
    %827 = vmatpush2.msra.mxu0 0.0
    %828 = vmatprep.subr.mxu0 0.0
    %829 = vmatpush2.msra.mxu0 0.0
    %830 = vmatprep.subr.mxu0 0.0
    %831 = vmatpush2.msra.mxu0 0.0
    %832 = vmatprep.subr.mxu0 0.0
    %833 = vmatpush2.msra.mxu0 0.0
    %834 = vmatprep.subr.mxu0 0.0
    %835 = vmatpush2.msra.mxu0 0.0
    %836 = vmatprep.subr.mxu0 0.0
    %837 = vmatpush2.msra.mxu0 0.0
    %838 = vmatprep.subr.mxu0 0.0
    %839 = vmatpush2.msra.mxu0 0.0
    %840 = vmatprep.subr.mxu0 0.0
    %841 = vmatpush2.msra.mxu0 0.0
    %842 = vmatprep.subr.mxu0 0.0
    %843 = vmatpush2.msra.mxu0 0.0
    %844 = vmatprep.subr.mxu0 0.0
    %845 = vmatpush2.msra.mxu0 0.0
    %846 = vmatprep.subr.mxu0 0.0
    %847 = vmatpush2.msra.mxu0 0.0
    %848 = vmatprep.subr.mxu0 0.0
    %849 = vmatpush2.msra.mxu0 0.0
    %850 = vmatprep.subr.mxu0 0.0
    %851 = vmatpush2.msra.mxu0 0.0
    %852 = vmatprep.subr.mxu0 0.0
    %853 = vmatpush2.msra.mxu0 0.0
    %854 = vmatprep.mubr.f32.mxu0 0.0
    %855 = vmatmul.mubr.f32.gmra.mxu0 %v788
    %v856 = vpop.f32.mrf.mxu0
    %v857 = vadd.f32 %v785, %v856
    %v858 = vpop.f32.mrf.mxu0
    %859 = vdwg.mxu0
    %v860 = vmax.f32 %v857, 0.0
    %s861 = scalar_lea.vmem [#allocation2], 64
    %v862 = vld [vmem:[%s861] sm:$0xff]
    %v863 = vld [vmem:[%s861 + $0x8] sm:$0xff]
    %v864 = vld [vmem:[%s861 + $0x10] sm:$0xff]
    %v865 = vld [vmem:[%s861 + $0x18] sm:$0xff]
    %s866 = scalar_lea.vmem %s5, 2
    %v867 = vld [vmem:[%s866] sm:$0x1]
    %v869 = vlaneseq
    %v870 = vshrl.u32 %v869, 7
    %v871 = vsub.s32 0, %v870
    %v872 = vrot.slane %v867, %v871
    %v875 = vsel %vm90, %v860, 0
    %877 = vmatprep.subr.mxu0 0.0
    %878 = vmatpush1.msra.mxu0 0.0
    %879 = vmatprep.subr.mxu0 0.0
    %880 = vmatpush1.msra.mxu0 0.0
    %881 = vmatprep.subr.mxu0 0.0
    %882 = vmatpush1.msra.mxu0 0.0
    %883 = vmatprep.subr.mxu0 0.0
    %884 = vmatpush1.msra.mxu0 0.0
    %885 = vmatprep.subr.mxu0 0.0
    %886 = vmatpush1.msra.mxu0 0.0
    %887 = vmatprep.subr.mxu0 0.0
    %888 = vmatpush1.msra.mxu0 0.0
    %889 = vmatprep.subr.mxu0 0.0
    %890 = vmatpush1.msra.mxu0 0.0
    %891 = vmatprep.subr.mxu0 0.0
    %892 = vmatpush1.msra.mxu0 0.0
    %893 = vmatprep.subr.mxu0 0.0
    %894 = vmatpush1.msra.mxu0 0.0
    %895 = vmatprep.subr.mxu0 0.0
    %896 = vmatpush1.msra.mxu0 0.0
    %897 = vmatprep.subr.mxu0 0.0
    %898 = vmatpush1.msra.mxu0 0.0
    %899 = vmatprep.subr.mxu0 0.0
    %900 = vmatpush1.msra.mxu0 0.0
    %901 = vmatprep.subr.mxu0 0.0
    %902 = vmatpush1.msra.mxu0 %v865
    %903 = vmatprep.subr.mxu0 0.0
    %904 = vmatpush1.msra.mxu0 %v864
    %905 = vmatprep.subr.mxu0 0.0
    %906 = vmatpush1.msra.mxu0 %v863
    %907 = vmatprep.subr.mxu0 0.0
    %908 = vmatpush1.msra.mxu0 %v862
    %909 = vmatprep.subr.mxu0 0.0
    %910 = vmatpush2.msra.mxu0 0.0
    %911 = vmatprep.subr.mxu0 0.0
    %912 = vmatpush2.msra.mxu0 0.0
    %913 = vmatprep.subr.mxu0 0.0
    %914 = vmatpush2.msra.mxu0 0.0
    %915 = vmatprep.subr.mxu0 0.0
    %916 = vmatpush2.msra.mxu0 0.0
    %917 = vmatprep.subr.mxu0 0.0
    %918 = vmatpush2.msra.mxu0 0.0
    %919 = vmatprep.subr.mxu0 0.0
    %920 = vmatpush2.msra.mxu0 0.0
    %921 = vmatprep.subr.mxu0 0.0
    %922 = vmatpush2.msra.mxu0 0.0
    %923 = vmatprep.subr.mxu0 0.0
    %924 = vmatpush2.msra.mxu0 0.0
    %925 = vmatprep.subr.mxu0 0.0
    %926 = vmatpush2.msra.mxu0 0.0
    %927 = vmatprep.subr.mxu0 0.0
    %928 = vmatpush2.msra.mxu0 0.0
    %929 = vmatprep.subr.mxu0 0.0
    %930 = vmatpush2.msra.mxu0 0.0
    %931 = vmatprep.subr.mxu0 0.0
    %932 = vmatpush2.msra.mxu0 0.0
    %933 = vmatprep.subr.mxu0 0.0
    %934 = vmatpush2.msra.mxu0 0.0
    %935 = vmatprep.subr.mxu0 0.0
    %936 = vmatpush2.msra.mxu0 0.0
    %937 = vmatprep.subr.mxu0 0.0
    %938 = vmatpush2.msra.mxu0 0.0
    %939 = vmatprep.subr.mxu0 0.0
    %940 = vmatpush2.msra.mxu0 0.0
    %941 = vmatprep.mubr.f32.mxu0 0.0
    %942 = vmatmul.mubr.f32.gmra.mxu0 %v875
    %v943 = vpop.f32.mrf.mxu0
    %v944 = vadd.f32 %v872, %v943
    %v945 = vpop.f32.mrf.mxu0
    %946 = vdwg.mxu0
    %v947 = vmax.f32 %v944, 0.0
    %s948 = scalar_lea.vmem [#allocation2], 96
    %v949 = vld [vmem:[%s948] sm:$0xff]
    %v950 = vld [vmem:[%s948 + $0x8] sm:$0xff]
    %v951 = vld [vmem:[%s948 + $0x10] sm:$0xff]
    %v952 = vld [vmem:[%s948 + $0x18] sm:$0xff]
    %s953 = scalar_lea.vmem %s5, 3
    %v954 = vld [vmem:[%s953] sm:$0x1]
    %v956 = vlaneseq
    %v957 = vshrl.u32 %v956, 7
    %v958 = vsub.s32 0, %v957
    %v959 = vrot.slane %v954, %v958
    %v962 = vsel %vm90, %v947, 0
    %964 = vmatprep.subr.mxu0 0.0
    %965 = vmatpush1.msra.mxu0 0.0
    %966 = vmatprep.subr.mxu0 0.0
    %967 = vmatpush1.msra.mxu0 0.0
    %968 = vmatprep.subr.mxu0 0.0
    %969 = vmatpush1.msra.mxu0 0.0
    %970 = vmatprep.subr.mxu0 0.0
    %971 = vmatpush1.msra.mxu0 0.0
    %972 = vmatprep.subr.mxu0 0.0
    %973 = vmatpush1.msra.mxu0 0.0
    %974 = vmatprep.subr.mxu0 0.0
    %975 = vmatpush1.msra.mxu0 0.0
    %976 = vmatprep.subr.mxu0 0.0
    %977 = vmatpush1.msra.mxu0 0.0
    %978 = vmatprep.subr.mxu0 0.0
    %979 = vmatpush1.msra.mxu0 0.0
    %980 = vmatprep.subr.mxu0 0.0
    %981 = vmatpush1.msra.mxu0 0.0
    %982 = vmatprep.subr.mxu0 0.0
    %983 = vmatpush1.msra.mxu0 0.0
    %984 = vmatprep.subr.mxu0 0.0
    %985 = vmatpush1.msra.mxu0 0.0
    %986 = vmatprep.subr.mxu0 0.0
    %987 = vmatpush1.msra.mxu0 0.0
    %988 = vmatprep.subr.mxu0 0.0
    %989 = vmatpush1.msra.mxu0 %v952
    %990 = vmatprep.subr.mxu0 0.0
    %991 = vmatpush1.msra.mxu0 %v951
    %992 = vmatprep.subr.mxu0 0.0
    %993 = vmatpush1.msra.mxu0 %v950
    %994 = vmatprep.subr.mxu0 0.0
    %995 = vmatpush1.msra.mxu0 %v949
    %996 = vmatprep.subr.mxu0 0.0
    %997 = vmatpush2.msra.mxu0 0.0
    %998 = vmatprep.subr.mxu0 0.0
    %999 = vmatpush2.msra.mxu0 0.0
    %1000 = vmatprep.subr.mxu0 0.0
    %1001 = vmatpush2.msra.mxu0 0.0
    %1002 = vmatprep.subr.mxu0 0.0
    %1003 = vmatpush2.msra.mxu0 0.0
    %1004 = vmatprep.subr.mxu0 0.0
    %1005 = vmatpush2.msra.mxu0 0.0
    %1006 = vmatprep.subr.mxu0 0.0
    %1007 = vmatpush2.msra.mxu0 0.0
    %1008 = vmatprep.subr.mxu0 0.0
    %1009 = vmatpush2.msra.mxu0 0.0
    %1010 = vmatprep.subr.mxu0 0.0
    %1011 = vmatpush2.msra.mxu0 0.0
    %1012 = vmatprep.subr.mxu0 0.0
    %1013 = vmatpush2.msra.mxu0 0.0
    %1014 = vmatprep.subr.mxu0 0.0
    %1015 = vmatpush2.msra.mxu0 0.0
    %1016 = vmatprep.subr.mxu0 0.0
    %1017 = vmatpush2.msra.mxu0 0.0
    %1018 = vmatprep.subr.mxu0 0.0
    %1019 = vmatpush2.msra.mxu0 0.0
    %1020 = vmatprep.subr.mxu0 0.0
    %1021 = vmatpush2.msra.mxu0 0.0
    %1022 = vmatprep.subr.mxu0 0.0
    %1023 = vmatpush2.msra.mxu0 0.0
    %1024 = vmatprep.subr.mxu0 0.0
    %1025 = vmatpush2.msra.mxu0 0.0
    %1026 = vmatprep.subr.mxu0 0.0
    %1027 = vmatpush2.msra.mxu0 0.0
    %1028 = vmatprep.mubr.f32.mxu0 0.0
    %1029 = vmatmul.mubr.f32.gmra.mxu0 %v962
    %v1030 = vpop.f32.mrf.mxu0
    %v1031 = vadd.f32 %v959, %v1030
    %v1032 = vpop.f32.mrf.mxu0
    %1033 = vdwg.mxu0
    %v1034 = vmax.f32 %v1031, 0.0
    %s1035 = scalar_lea.vmem [#allocation4], 32
    %v1036 = vld [vmem:[%s1035] sm:$0xff]
    %v1037 = vld [vmem:[%s1035 + $0x8] sm:$0xff]
    %v1038 = vld [vmem:[%s1035 + $0x10] sm:$0xff]
    %v1039 = vld [vmem:[%s1035 + $0x18] sm:$0xff]
    %s1040 = scalar_lea.vmem %s7, 1
    %v1041 = vld [vmem:[%s1040] sm:$0x1]
    %v1043 = vlaneseq
    %v1044 = vshrl.u32 %v1043, 7
    %v1045 = vsub.s32 0, %v1044
    %v1046 = vrot.slane %v1041, %v1045
    %v1049 = vsel %vm90, %v1034, 0
    %1051 = vmatprep.subr.mxu0 0.0
    %1052 = vmatpush1.msra.mxu0 0.0
    %1053 = vmatprep.subr.mxu0 0.0
    %1054 = vmatpush1.msra.mxu0 0.0
    %1055 = vmatprep.subr.mxu0 0.0
    %1056 = vmatpush1.msra.mxu0 0.0
    %1057 = vmatprep.subr.mxu0 0.0
    %1058 = vmatpush1.msra.mxu0 0.0
    %1059 = vmatprep.subr.mxu0 0.0
    %1060 = vmatpush1.msra.mxu0 0.0
    %1061 = vmatprep.subr.mxu0 0.0
    %1062 = vmatpush1.msra.mxu0 0.0
    %1063 = vmatprep.subr.mxu0 0.0
    %1064 = vmatpush1.msra.mxu0 0.0
    %1065 = vmatprep.subr.mxu0 0.0
    %1066 = vmatpush1.msra.mxu0 0.0
    %1067 = vmatprep.subr.mxu0 0.0
    %1068 = vmatpush1.msra.mxu0 0.0
    %1069 = vmatprep.subr.mxu0 0.0
    %1070 = vmatpush1.msra.mxu0 0.0
    %1071 = vmatprep.subr.mxu0 0.0
    %1072 = vmatpush1.msra.mxu0 0.0
    %1073 = vmatprep.subr.mxu0 0.0
    %1074 = vmatpush1.msra.mxu0 0.0
    %1075 = vmatprep.subr.mxu0 0.0
    %1076 = vmatpush1.msra.mxu0 %v1039
    %1077 = vmatprep.subr.mxu0 0.0
    %1078 = vmatpush1.msra.mxu0 %v1038
    %1079 = vmatprep.subr.mxu0 0.0
    %1080 = vmatpush1.msra.mxu0 %v1037
    %1081 = vmatprep.subr.mxu0 0.0
    %1082 = vmatpush1.msra.mxu0 %v1036
    %1083 = vmatprep.subr.mxu0 0.0
    %1084 = vmatpush2.msra.mxu0 0.0
    %1085 = vmatprep.subr.mxu0 0.0
    %1086 = vmatpush2.msra.mxu0 0.0
    %1087 = vmatprep.subr.mxu0 0.0
    %1088 = vmatpush2.msra.mxu0 0.0
    %1089 = vmatprep.subr.mxu0 0.0
    %1090 = vmatpush2.msra.mxu0 0.0
    %1091 = vmatprep.subr.mxu0 0.0
    %1092 = vmatpush2.msra.mxu0 0.0
    %1093 = vmatprep.subr.mxu0 0.0
    %1094 = vmatpush2.msra.mxu0 0.0
    %1095 = vmatprep.subr.mxu0 0.0
    %1096 = vmatpush2.msra.mxu0 0.0
    %1097 = vmatprep.subr.mxu0 0.0
    %1098 = vmatpush2.msra.mxu0 0.0
    %1099 = vmatprep.subr.mxu0 0.0
    %1100 = vmatpush2.msra.mxu0 0.0
    %1101 = vmatprep.subr.mxu0 0.0
    %1102 = vmatpush2.msra.mxu0 0.0
    %1103 = vmatprep.subr.mxu0 0.0
    %1104 = vmatpush2.msra.mxu0 0.0
    %1105 = vmatprep.subr.mxu0 0.0
    %1106 = vmatpush2.msra.mxu0 0.0
    %1107 = vmatprep.subr.mxu0 0.0
    %1108 = vmatpush2.msra.mxu0 0.0
    %1109 = vmatprep.subr.mxu0 0.0
    %1110 = vmatpush2.msra.mxu0 0.0
    %1111 = vmatprep.subr.mxu0 0.0
    %1112 = vmatpush2.msra.mxu0 0.0
    %1113 = vmatprep.subr.mxu0 0.0
    %1114 = vmatpush2.msra.mxu0 0.0
    %1115 = vmatprep.mubr.f32.mxu0 0.0
    %1116 = vmatmul.mubr.f32.gmra.mxu0 %v1049
    %v1117 = vpop.f32.mrf.mxu0
    %v1118 = vadd.f32 %v1046, %v1117
    %v1119 = vpop.f32.mrf.mxu0
    %1120 = vdwg.mxu0
    %v1121 = vsub.f32 %v425, %v1118
    %v1122 = vld [vmem:[%s2] sm:$0xff]
    %v1123 = vld [vmem:[%s2 + $0x8] sm:$0xff]
    %v1124 = vld [vmem:[%s2 + $0x10] sm:$0xff]
    %v1125 = vld [vmem:[%s2 + $0x18] sm:$0xff]
    %v1126 = vld [vmem:[%s3] sm:$0x1]
    %v1128 = vlaneseq
    %v1129 = vshrl.u32 %v1128, 7
    %v1130 = vsub.s32 0, %v1129
    %v1131 = vrot.slane %v1126, %v1130
    %v1134 = vsel %vm90, %v1121, 0
    %1136 = vmatprep.subr.mxu0 0.0
    %1137 = vmatpush1.msra.mxu0 0.0
    %1138 = vmatprep.subr.mxu0 0.0
    %1139 = vmatpush1.msra.mxu0 0.0
    %1140 = vmatprep.subr.mxu0 0.0
    %1141 = vmatpush1.msra.mxu0 0.0
    %1142 = vmatprep.subr.mxu0 0.0
    %1143 = vmatpush1.msra.mxu0 0.0
    %1144 = vmatprep.subr.mxu0 0.0
    %1145 = vmatpush1.msra.mxu0 0.0
    %1146 = vmatprep.subr.mxu0 0.0
    %1147 = vmatpush1.msra.mxu0 0.0
    %1148 = vmatprep.subr.mxu0 0.0
    %1149 = vmatpush1.msra.mxu0 0.0
    %1150 = vmatprep.subr.mxu0 0.0
    %1151 = vmatpush1.msra.mxu0 0.0
    %1152 = vmatprep.subr.mxu0 0.0
    %1153 = vmatpush1.msra.mxu0 0.0
    %1154 = vmatprep.subr.mxu0 0.0
    %1155 = vmatpush1.msra.mxu0 0.0
    %1156 = vmatprep.subr.mxu0 0.0
    %1157 = vmatpush1.msra.mxu0 0.0
    %1158 = vmatprep.subr.mxu0 0.0
    %1159 = vmatpush1.msra.mxu0 0.0
    %1160 = vmatprep.subr.mxu0 0.0
    %1161 = vmatpush1.msra.mxu0 %v1125
    %1162 = vmatprep.subr.mxu0 0.0
    %1163 = vmatpush1.msra.mxu0 %v1124
    %1164 = vmatprep.subr.mxu0 0.0
    %1165 = vmatpush1.msra.mxu0 %v1123
    %1166 = vmatprep.subr.mxu0 0.0
    %1167 = vmatpush1.msra.mxu0 %v1122
    %1168 = vmatprep.subr.mxu0 0.0
    %1169 = vmatpush2.msra.mxu0 0.0
    %1170 = vmatprep.subr.mxu0 0.0
    %1171 = vmatpush2.msra.mxu0 0.0
    %1172 = vmatprep.subr.mxu0 0.0
    %1173 = vmatpush2.msra.mxu0 0.0
    %1174 = vmatprep.subr.mxu0 0.0
    %1175 = vmatpush2.msra.mxu0 0.0
    %1176 = vmatprep.subr.mxu0 0.0
    %1177 = vmatpush2.msra.mxu0 0.0
    %1178 = vmatprep.subr.mxu0 0.0
    %1179 = vmatpush2.msra.mxu0 0.0
    %1180 = vmatprep.subr.mxu0 0.0
    %1181 = vmatpush2.msra.mxu0 0.0
    %1182 = vmatprep.subr.mxu0 0.0
    %1183 = vmatpush2.msra.mxu0 0.0
    %1184 = vmatprep.subr.mxu0 0.0
    %1185 = vmatpush2.msra.mxu0 0.0
    %1186 = vmatprep.subr.mxu0 0.0
    %1187 = vmatpush2.msra.mxu0 0.0
    %1188 = vmatprep.subr.mxu0 0.0
    %1189 = vmatpush2.msra.mxu0 0.0
    %1190 = vmatprep.subr.mxu0 0.0
    %1191 = vmatpush2.msra.mxu0 0.0
    %1192 = vmatprep.subr.mxu0 0.0
    %1193 = vmatpush2.msra.mxu0 0.0
    %1194 = vmatprep.subr.mxu0 0.0
    %1195 = vmatpush2.msra.mxu0 0.0
    %1196 = vmatprep.subr.mxu0 0.0
    %1197 = vmatpush2.msra.mxu0 0.0
    %1198 = vmatprep.subr.mxu0 0.0
    %1199 = vmatpush2.msra.mxu0 0.0
    %1200 = vmatprep.mubr.f32.mxu0 0.0
    %1201 = vmatmul.mubr.f32.gmra.mxu0 %v1134
    %v1202 = vpop.f32.mrf.mxu0
    %v1203 = vadd.f32 %v1131, %v1202
    %v1204 = vpop.f32.mrf.mxu0
    %1205 = vdwg.mxu0
    %v1206 = vmax.f32 %v1203, 0.0
    %v1207 = vld [vmem:[#allocation2] sm:$0xff]
    %v1208 = vld [vmem:[#allocation2 + $0x8] sm:$0xff]
    %v1209 = vld [vmem:[#allocation2 + $0x10] sm:$0xff]
    %v1210 = vld [vmem:[#allocation2 + $0x18] sm:$0xff]
    %v1211 = vld [vmem:[%s5] sm:$0x1]
    %v1213 = vlaneseq
    %v1214 = vshrl.u32 %v1213, 7
    %v1215 = vsub.s32 0, %v1214
    %v1216 = vrot.slane %v1211, %v1215
    %v1219 = vsel %vm90, %v1206, 0
    %1221 = vmatprep.subr.mxu0 0.0
    %1222 = vmatpush1.msra.mxu0 0.0
    %1223 = vmatprep.subr.mxu0 0.0
    %1224 = vmatpush1.msra.mxu0 0.0
    %1225 = vmatprep.subr.mxu0 0.0
    %1226 = vmatpush1.msra.mxu0 0.0
    %1227 = vmatprep.subr.mxu0 0.0
    %1228 = vmatpush1.msra.mxu0 0.0
    %1229 = vmatprep.subr.mxu0 0.0
    %1230 = vmatpush1.msra.mxu0 0.0
    %1231 = vmatprep.subr.mxu0 0.0
    %1232 = vmatpush1.msra.mxu0 0.0
    %1233 = vmatprep.subr.mxu0 0.0
    %1234 = vmatpush1.msra.mxu0 0.0
    %1235 = vmatprep.subr.mxu0 0.0
    %1236 = vmatpush1.msra.mxu0 0.0
    %1237 = vmatprep.subr.mxu0 0.0
    %1238 = vmatpush1.msra.mxu0 0.0
    %1239 = vmatprep.subr.mxu0 0.0
    %1240 = vmatpush1.msra.mxu0 0.0
    %1241 = vmatprep.subr.mxu0 0.0
    %1242 = vmatpush1.msra.mxu0 0.0
    %1243 = vmatprep.subr.mxu0 0.0
    %1244 = vmatpush1.msra.mxu0 0.0
    %1245 = vmatprep.subr.mxu0 0.0
    %1246 = vmatpush1.msra.mxu0 %v1210
    %1247 = vmatprep.subr.mxu0 0.0
    %1248 = vmatpush1.msra.mxu0 %v1209
    %1249 = vmatprep.subr.mxu0 0.0
    %1250 = vmatpush1.msra.mxu0 %v1208
    %1251 = vmatprep.subr.mxu0 0.0
    %1252 = vmatpush1.msra.mxu0 %v1207
    %1253 = vmatprep.subr.mxu0 0.0
    %1254 = vmatpush2.msra.mxu0 0.0
    %1255 = vmatprep.subr.mxu0 0.0
    %1256 = vmatpush2.msra.mxu0 0.0
    %1257 = vmatprep.subr.mxu0 0.0
    %1258 = vmatpush2.msra.mxu0 0.0
    %1259 = vmatprep.subr.mxu0 0.0
    %1260 = vmatpush2.msra.mxu0 0.0
    %1261 = vmatprep.subr.mxu0 0.0
    %1262 = vmatpush2.msra.mxu0 0.0
    %1263 = vmatprep.subr.mxu0 0.0
    %1264 = vmatpush2.msra.mxu0 0.0
    %1265 = vmatprep.subr.mxu0 0.0
    %1266 = vmatpush2.msra.mxu0 0.0
    %1267 = vmatprep.subr.mxu0 0.0
    %1268 = vmatpush2.msra.mxu0 0.0
    %1269 = vmatprep.subr.mxu0 0.0
    %1270 = vmatpush2.msra.mxu0 0.0
    %1271 = vmatprep.subr.mxu0 0.0
    %1272 = vmatpush2.msra.mxu0 0.0
    %1273 = vmatprep.subr.mxu0 0.0
    %1274 = vmatpush2.msra.mxu0 0.0
    %1275 = vmatprep.subr.mxu0 0.0
    %1276 = vmatpush2.msra.mxu0 0.0
    %1277 = vmatprep.subr.mxu0 0.0
    %1278 = vmatpush2.msra.mxu0 0.0
    %1279 = vmatprep.subr.mxu0 0.0
    %1280 = vmatpush2.msra.mxu0 0.0
    %1281 = vmatprep.subr.mxu0 0.0
    %1282 = vmatpush2.msra.mxu0 0.0
    %1283 = vmatprep.subr.mxu0 0.0
    %1284 = vmatpush2.msra.mxu0 0.0
    %1285 = vmatprep.mubr.f32.mxu0 0.0
    %1286 = vmatmul.mubr.f32.gmra.mxu0 %v1219
    %v1287 = vpop.f32.mrf.mxu0
    %v1288 = vadd.f32 %v1216, %v1287
    %v1289 = vpop.f32.mrf.mxu0
    %1290 = vdwg.mxu0
    %v1291 = vmax.f32 %v1288, 0.0
    %s1292 = scalar_lea.vmem [#allocation2], 32
    %v1293 = vld [vmem:[%s1292] sm:$0xff]
    %v1294 = vld [vmem:[%s1292 + $0x8] sm:$0xff]
    %v1295 = vld [vmem:[%s1292 + $0x10] sm:$0xff]
    %v1296 = vld [vmem:[%s1292 + $0x18] sm:$0xff]
    %s1297 = scalar_lea.vmem %s5, 1
    %v1298 = vld [vmem:[%s1297] sm:$0x1]
    %v1300 = vlaneseq
    %v1301 = vshrl.u32 %v1300, 7
    %v1302 = vsub.s32 0, %v1301
    %v1303 = vrot.slane %v1298, %v1302
    %v1306 = vsel %vm90, %v1291, 0
    %1308 = vmatprep.subr.mxu0 0.0
    %1309 = vmatpush1.msra.mxu0 0.0
    %1310 = vmatprep.subr.mxu0 0.0
    %1311 = vmatpush1.msra.mxu0 0.0
    %1312 = vmatprep.subr.mxu0 0.0
    %1313 = vmatpush1.msra.mxu0 0.0
    %1314 = vmatprep.subr.mxu0 0.0
    %1315 = vmatpush1.msra.mxu0 0.0
    %1316 = vmatprep.subr.mxu0 0.0
    %1317 = vmatpush1.msra.mxu0 0.0
    %1318 = vmatprep.subr.mxu0 0.0
    %1319 = vmatpush1.msra.mxu0 0.0
    %1320 = vmatprep.subr.mxu0 0.0
    %1321 = vmatpush1.msra.mxu0 0.0
    %1322 = vmatprep.subr.mxu0 0.0
    %1323 = vmatpush1.msra.mxu0 0.0
    %1324 = vmatprep.subr.mxu0 0.0
    %1325 = vmatpush1.msra.mxu0 0.0
    %1326 = vmatprep.subr.mxu0 0.0
    %1327 = vmatpush1.msra.mxu0 0.0
    %1328 = vmatprep.subr.mxu0 0.0
    %1329 = vmatpush1.msra.mxu0 0.0
    %1330 = vmatprep.subr.mxu0 0.0
    %1331 = vmatpush1.msra.mxu0 0.0
    %1332 = vmatprep.subr.mxu0 0.0
    %1333 = vmatpush1.msra.mxu0 %v1296
    %1334 = vmatprep.subr.mxu0 0.0
    %1335 = vmatpush1.msra.mxu0 %v1295
    %1336 = vmatprep.subr.mxu0 0.0
    %1337 = vmatpush1.msra.mxu0 %v1294
    %1338 = vmatprep.subr.mxu0 0.0
    %1339 = vmatpush1.msra.mxu0 %v1293
    %1340 = vmatprep.subr.mxu0 0.0
    %1341 = vmatpush2.msra.mxu0 0.0
    %1342 = vmatprep.subr.mxu0 0.0
    %1343 = vmatpush2.msra.mxu0 0.0
    %1344 = vmatprep.subr.mxu0 0.0
    %1345 = vmatpush2.msra.mxu0 0.0
    %1346 = vmatprep.subr.mxu0 0.0
    %1347 = vmatpush2.msra.mxu0 0.0
    %1348 = vmatprep.subr.mxu0 0.0
    %1349 = vmatpush2.msra.mxu0 0.0
    %1350 = vmatprep.subr.mxu0 0.0
    %1351 = vmatpush2.msra.mxu0 0.0
    %1352 = vmatprep.subr.mxu0 0.0
    %1353 = vmatpush2.msra.mxu0 0.0
    %1354 = vmatprep.subr.mxu0 0.0
    %1355 = vmatpush2.msra.mxu0 0.0
    %1356 = vmatprep.subr.mxu0 0.0
    %1357 = vmatpush2.msra.mxu0 0.0
    %1358 = vmatprep.subr.mxu0 0.0
    %1359 = vmatpush2.msra.mxu0 0.0
    %1360 = vmatprep.subr.mxu0 0.0
    %1361 = vmatpush2.msra.mxu0 0.0
    %1362 = vmatprep.subr.mxu0 0.0
    %1363 = vmatpush2.msra.mxu0 0.0
    %1364 = vmatprep.subr.mxu0 0.0
    %1365 = vmatpush2.msra.mxu0 0.0
    %1366 = vmatprep.subr.mxu0 0.0
    %1367 = vmatpush2.msra.mxu0 0.0
    %1368 = vmatprep.subr.mxu0 0.0
    %1369 = vmatpush2.msra.mxu0 0.0
    %1370 = vmatprep.subr.mxu0 0.0
    %1371 = vmatpush2.msra.mxu0 0.0
    %1372 = vmatprep.mubr.f32.mxu0 0.0
    %1373 = vmatmul.mubr.f32.gmra.mxu0 %v1306
    %v1374 = vpop.f32.mrf.mxu0
    %v1375 = vadd.f32 %v1303, %v1374
    %v1376 = vpop.f32.mrf.mxu0
    %1377 = vdwg.mxu0
    %v1378 = vmax.f32 %v1375, 0.0
    %v1379 = vld [vmem:[#allocation4] sm:$0xff]
    %v1380 = vld [vmem:[#allocation4 + $0x8] sm:$0xff]
    %v1381 = vld [vmem:[#allocation4 + $0x10] sm:$0xff]
    %v1382 = vld [vmem:[#allocation4 + $0x18] sm:$0xff]
    %v1383 = vld [vmem:[%s7] sm:$0x1]
    %v1385 = vlaneseq
    %v1386 = vshrl.u32 %v1385, 7
    %v1387 = vsub.s32 0, %v1386
    %v1388 = vrot.slane %v1383, %v1387
    %v1391 = vsel %vm90, %v1378, 0
    %1393 = vmatprep.subr.mxu0 0.0
    %1394 = vmatpush1.msra.mxu0 0.0
    %1395 = vmatprep.subr.mxu0 0.0
    %1396 = vmatpush1.msra.mxu0 0.0
    %1397 = vmatprep.subr.mxu0 0.0
    %1398 = vmatpush1.msra.mxu0 0.0
    %1399 = vmatprep.subr.mxu0 0.0
    %1400 = vmatpush1.msra.mxu0 0.0
    %1401 = vmatprep.subr.mxu0 0.0
    %1402 = vmatpush1.msra.mxu0 0.0
    %1403 = vmatprep.subr.mxu0 0.0
    %1404 = vmatpush1.msra.mxu0 0.0
    %1405 = vmatprep.subr.mxu0 0.0
    %1406 = vmatpush1.msra.mxu0 0.0
    %1407 = vmatprep.subr.mxu0 0.0
    %1408 = vmatpush1.msra.mxu0 0.0
    %1409 = vmatprep.subr.mxu0 0.0
    %1410 = vmatpush1.msra.mxu0 0.0
    %1411 = vmatprep.subr.mxu0 0.0
    %1412 = vmatpush1.msra.mxu0 0.0
    %1413 = vmatprep.subr.mxu0 0.0
    %1414 = vmatpush1.msra.mxu0 0.0
    %1415 = vmatprep.subr.mxu0 0.0
    %1416 = vmatpush1.msra.mxu0 0.0
    %1417 = vmatprep.subr.mxu0 0.0
    %1418 = vmatpush1.msra.mxu0 %v1382
    %1419 = vmatprep.subr.mxu0 0.0
    %1420 = vmatpush1.msra.mxu0 %v1381
    %1421 = vmatprep.subr.mxu0 0.0
    %1422 = vmatpush1.msra.mxu0 %v1380
    %1423 = vmatprep.subr.mxu0 0.0
    %1424 = vmatpush1.msra.mxu0 %v1379
    %1425 = vmatprep.subr.mxu0 0.0
    %1426 = vmatpush2.msra.mxu0 0.0
    %1427 = vmatprep.subr.mxu0 0.0
    %1428 = vmatpush2.msra.mxu0 0.0
    %1429 = vmatprep.subr.mxu0 0.0
    %1430 = vmatpush2.msra.mxu0 0.0
    %1431 = vmatprep.subr.mxu0 0.0
    %1432 = vmatpush2.msra.mxu0 0.0
    %1433 = vmatprep.subr.mxu0 0.0
    %1434 = vmatpush2.msra.mxu0 0.0
    %1435 = vmatprep.subr.mxu0 0.0
    %1436 = vmatpush2.msra.mxu0 0.0
    %1437 = vmatprep.subr.mxu0 0.0
    %1438 = vmatpush2.msra.mxu0 0.0
    %1439 = vmatprep.subr.mxu0 0.0
    %1440 = vmatpush2.msra.mxu0 0.0
    %1441 = vmatprep.subr.mxu0 0.0
    %1442 = vmatpush2.msra.mxu0 0.0
    %1443 = vmatprep.subr.mxu0 0.0
    %1444 = vmatpush2.msra.mxu0 0.0
    %1445 = vmatprep.subr.mxu0 0.0
    %1446 = vmatpush2.msra.mxu0 0.0
    %1447 = vmatprep.subr.mxu0 0.0
    %1448 = vmatpush2.msra.mxu0 0.0
    %1449 = vmatprep.subr.mxu0 0.0
    %1450 = vmatpush2.msra.mxu0 0.0
    %1451 = vmatprep.subr.mxu0 0.0
    %1452 = vmatpush2.msra.mxu0 0.0
    %1453 = vmatprep.subr.mxu0 0.0
    %1454 = vmatpush2.msra.mxu0 0.0
    %1455 = vmatprep.subr.mxu0 0.0
    %1456 = vmatpush2.msra.mxu0 0.0
    %1457 = vmatprep.mubr.f32.mxu0 0.0
    %1458 = vmatmul.mubr.f32.gmra.mxu0 %v1391
    %v1459 = vpop.f32.mrf.mxu0
    %v1460 = vadd.f32 %v1388, %v1459
    %v1461 = vpop.f32.mrf.mxu0
    %1462 = vdwg.mxu0
    %v1463 = vsub.f32 %v773, %v1460
    %vm1464 = vcmask 254976
    %1465 = vst.msk [vmem:[%s8] sm:$0x3] %vm1464, %v1463
    %s1466 = scalar_lea.vmem %s8, 2
    %1467 = vst.msk [vmem:[%s1466] sm:$0x3] %vm1464, %v1121
    // Predicated region
    $region42: #{forward.1} parent=1 // pred_check
      _
    $region43: #{forward.1} parent=1 // pred_check_branch
      %1469 = sbr.rel (0) target = $region45
    $region44: #{forward.1} parent=1 // pred_region
      _
    $region45: #{forward.1} parent=1 // pred_fallthru
      _
    // Predicated region
    $region46: #{forward.1} parent=1 // pred_check
      _
    $region47: #{forward.1} parent=1 // pred_check_branch
      %1471 = sbr.rel (0) target = $region49
    $region48: #{forward.1} parent=1 // pred_region
      _
    $region49: #{forward.1} parent=1 // pred_fallthru
      _
    %1472 = vsyncpa [#allocation3], 1
    %1473 = vsyncpa [#allocation5], 1

</llo_original>
